<compile_context>
chip_gen: v7x
topology: tpu7x:2x2x1
jax: 0.10.0
libtpu: 0.0.40
codegen_flags: <defaults>
</compile_context>

<pallas_src>
import functools
import numpy as np
import jax
import jax.numpy as jnp
from jax.experimental import pallas as pl
from jax.experimental.pallas import tpu as pltpu


# ---------------------------------------------------------------------------
# Pallas kernel: direct convolution (tap accumulation in-kernel), fused
# bias + LeakyReLU(0.1) + optional residual add.  bf16 in, f32 accumulate.
# ---------------------------------------------------------------------------
def _conv_kernel(*refs, ks, stride, ho, wo, act, nph, has_skip):
    """refs = nph phase refs, w_ref, b_ref, (skip_ref), o_ref.

    phase p=(py,px) holds x_padded[b, py::stride, px::stride, :]
      (block = one batch image, all Cin).
    w_ref : (ks*ks, Cin, TN)  bf16, BN scale pre-folded, tap = ky*ks + kx
    b_ref : (1, TN)           f32
    o_ref : (1, Ho, Wo, TN)   bf16
    """
    ph_refs = refs[:nph]
    w_ref = refs[nph]
    b_ref = refs[nph + 1]
    skip_ref = refs[nph + 2] if has_skip else None
    o_ref = refs[-1]

    tn = o_ref.shape[-1]
    bias = b_ref[...]                                   # (1, TN) f32

    def row_body(oh, carry):
        acc = jnp.zeros((wo, tn), jnp.float32)
        for t in range(ks * ks):
            ky, kx = t // ks, t % ks
            ph = ph_refs[(ky % stride) * stride + (kx % stride)]
            dy, dx = ky // stride, kx // stride
            lhs = ph[0, oh + dy, pl.ds(dx, wo), :]      # (Wo, Cin) bf16
            acc = acc + jnp.dot(lhs, w_ref[t],
                                preferred_element_type=jnp.float32)
        y = acc + bias
        if has_skip:
            y = y + skip_ref[0, oh].astype(jnp.float32)
        if act:                                         # LeakyReLU(0.1)
            y = jnp.where(y > 0, y, 0.1 * y)
        o_ref[0, oh] = y.astype(o_ref.dtype)
        return carry

    jax.lax.fori_loop(0, ho, row_body, 0)


@functools.lru_cache(maxsize=None)
def _build_conv_call(B, H, W, Cin, Cout, ks, stride, act, has_skip):
    pad = (ks - 1) // 2
    Ho = (H + 2 * pad - ks) // stride + 1
    Wo = (W + 2 * pad - ks) // stride + 1
    Hp, Wp = H + 2 * pad, W + 2 * pad
    assert Hp % stride == 0 and Wp % stride == 0
    nph = stride * stride
    ph_shape = (B, Hp // stride, Wp // stride, Cin)
    kk = ks * ks

    TN = Cout if Cout <= 256 else 256
    assert Cout % TN == 0
    nj = Cout // TN

    # Grid order: keep the larger of {weights, activations} resident across the
    # inner axis so it is not re-streamed from HBM.
    w_elems = kk * Cin * Cout
    a_elems = B * ph_shape[1] * ph_shape[2] * Cin
    b_major = (nj == 1) or ((B - 1) * w_elems <= (nj - 1) * a_elems)
    if b_major:
        grid = (B, nj)
        ph_idx = lambda b, j: (b, 0, 0, 0)
        w_idx = lambda b, j: (0, 0, j)
        bias_idx = lambda b, j: (0, j)
        out_idx = lambda b, j: (b, 0, 0, j)
    else:
        grid = (nj, B)
        ph_idx = lambda j, b: (b, 0, 0, 0)
        w_idx = lambda j, b: (0, 0, j)
        bias_idx = lambda j, b: (0, j)
        out_idx = lambda j, b: (b, 0, 0, j)

    in_specs = [pl.BlockSpec((1,) + ph_shape[1:], ph_idx)] * nph + [
        pl.BlockSpec((kk, Cin, TN), w_idx),
        pl.BlockSpec((1, TN), bias_idx),
    ]
    if has_skip:
        in_specs.append(pl.BlockSpec((1, Ho, Wo, TN), out_idx))
    out_spec = pl.BlockSpec((1, Ho, Wo, TN), out_idx)

    kernel = functools.partial(_conv_kernel, ks=ks, stride=stride, ho=Ho, wo=Wo,
                               act=act, nph=nph, has_skip=has_skip)

    flops = int(2 * B * Ho * Wo * kk * Cin * Cout)
    bytes_accessed = int(
        2 * (a_elems + w_elems + B * Ho * Wo * Cout
             + (B * Ho * Wo * Cout if has_skip else 0)) + 4 * Cout)

    return pl.pallas_call(
        kernel,
        out_shape=jax.ShapeDtypeStruct((B, Ho, Wo, Cout), jnp.bfloat16),
        grid_spec=pltpu.PrefetchScalarGridSpec(
            num_scalar_prefetch=0,
            grid=grid,
            in_specs=in_specs,
            out_specs=out_spec,
        ),
        compiler_params=pltpu.CompilerParams(
            dimension_semantics=("parallel", "parallel"),
            # fits comfortably under v7x's 64 MiB physical VMEM while giving
            # more head-room than the 16/32 MiB scoped defaults on v5e/v6e.
            vmem_limit_bytes=48 * 1024 * 1024,
        ),
        cost_estimate=pl.CostEstimate(flops=flops, transcendentals=0,
                                      bytes_accessed=bytes_accessed),
    )


def conv_layer(x, p, skip=None):
    """conv (+ folded BN) (+ LeakyReLU) (+ fused residual).  x: NHWC bf16."""
    B, H, W, Cin = x.shape
    ks, stride, act = p['ks'], p['stride'], p['act']
    Cout = p['w'].shape[-1]
    assert p['w'].shape == (ks * ks, Cin, Cout)
    pad = (ks - 1) // 2
    xp = jnp.pad(x, ((0, 0), (pad, pad), (pad, pad), (0, 0))) if pad else x
    if stride == 1:
        phases = (xp,)
    else:
        # 2x2 phase (space-to-depth) split: one cheap rearrangement, so all
        # in-kernel tap reads are contiguous (no strided VMEM slices).
        phases = tuple(xp[:, py::stride, px::stride, :]
                       for py in range(stride) for px in range(stride))
    call = _build_conv_call(B, H, W, Cin, Cout, ks, stride, bool(act),
                            skip is not None)
    args = list(phases) + [p['w'], p['b']]
    if skip is not None:
        args.append(skip)
    return call(*args)


def upsample2(x):
    # F.interpolate(scale_factor=2, mode='nearest')
    # TODO(synk): could be fused into the following 1x1 conv via its index_map.
    return jnp.repeat(jnp.repeat(x, 2, axis=1), 2, axis=2)


# ---------------------------------------------------------------------------
# Deterministic parameter construction mirroring YoloNet.__init__
# ---------------------------------------------------------------------------
def init_conv(key, nin, nout, ks, stride=1, bn=True, act=True):
    kw, kb = jax.random.split(key)
    fan_in = nin * ks * ks
    w = jax.random.normal(kw, (nout, nin, ks, ks), jnp.float32) / np.sqrt(fan_in)
    # (tap = ky*ks+kx, cin, cout) to match the kernel's tap ordering
    w = jnp.transpose(w, (2, 3, 1, 0)).reshape(ks * ks, nin, nout)
    if bn:
        # PyTorch BatchNorm2d defaults (eval): gamma=1, beta=0, mean=0, var=1
        eps = 1e-5
        gamma = jnp.ones((nout,), jnp.float32)
        beta = jnp.zeros((nout,), jnp.float32)
        running_mean = jnp.zeros((nout,), jnp.float32)
        running_var = jnp.ones((nout,), jnp.float32)
        scale = gamma / jnp.sqrt(running_var + eps)
        bias = beta - running_mean * scale
    else:
        scale = jnp.ones((nout,), jnp.float32)
        bias = jax.random.normal(kb, (nout,), jnp.float32) * 0.01  # conv bias
    w = (w * scale[None, None, :]).astype(jnp.bfloat16)  # fold BN scale
    return dict(w=w, b=bias.reshape(1, nout).astype(jnp.float32),
                ks=ks, stride=stride, act=act)


def map2cfg(kinds):
    """Python mirror of map2cfgDict (res layers occupy 3 cfg slots)."""
    idx, d = 0, {}
    for i, k in enumerate(kinds):
        if k == 'res':
            d[idx] = None
            d[idx + 1] = None
            idx += 2
        d[idx] = i
        idx += 1
    return d


def init_darknet(keys, blkList=(1, 2, 8, 8, 4), nout=32):
    layers = [('conv', init_conv(next(keys), 3, nout, 3, 1))]
    for i, nb in enumerate(blkList):
        c = nout * 2 ** i
        layers.append(('conv', init_conv(next(keys), c, 2 * c, 3, 2)))
        for _ in range(nb):
            layers.append(('res', (init_conv(next(keys), 2 * c, c, 1, 1),
                                   init_conv(next(keys), c, 2 * c, 3, 1))))
    return layers


def init_predet(keys, nin, nout, numClass=80):
    layers = []
    n_in = nin
    for i in range(3):
        layers.append(init_conv(next(keys), n_in, nout, 1))
        layers.append(init_conv(next(keys), nout, nout * 2, 3))
        if i == 0:
            n_in = nout * 2
    # final plain Conv2d(nout*2, (numClass+5)*3, 1) with bias, no BN, no act
    layers.append(init_conv(next(keys), nout * 2, (numClass + 5) * 3, 1,
                            bn=False, act=False))
    return layers


def init_yolonet_params(key, numClass=80):
    keys = iter(jax.random.split(key, 256))
    params = {}
    params['feature'] = init_darknet(keys)
    m2c = map2cfg([k for k, _ in params['feature']])
    # Darknet.addCachedOut(61) / (36) -> mlist indices via map2cfgDict
    params['feature_cache_idx'] = (m2c[61], m2c[36])      # = (23, 14)
    params['pre_det1'] = init_predet(keys, 1024, 512, numClass)
    params['up1'] = init_conv(next(keys), 512, 256, 1, 1)
    params['pre_det2'] = init_predet(keys, 768, 256, numClass)
    params['up2'] = init_conv(next(keys), 256, 128, 1, 1)
    params['pre_det3'] = init_predet(keys, 384, 128, numClass)
    # PreDetectionConvGroup.addCachedOut(-3) -> mlist index 7 - 3 = 4
    params['predet_cache_idx'] = 4
    return params


# ---------------------------------------------------------------------------
# Forward passes
# ---------------------------------------------------------------------------
def darknet_forward(x, layers, cache_idx):
    cache = {}
    for i, (kind, p) in enumerate(layers):
        if kind == 'conv':
            x = conv_layer(x, p)
        else:  # residual block: x + conv3x3(conv1x1(x)); add fused into conv2
            p1, p2 = p
            x = conv_layer(conv_layer(x, p1), p2, skip=x)
        if i in cache_idx:
            cache[i] = x
    return x, cache


def predet_forward(x, layers, cache_idx):
    cached = None
    for i, p in enumerate(layers):
        x = conv_layer(x, p)
        if i == cache_idx:
            cached = x
    return x, cached


def yolonet_forward(x_nchw, params):
    x = jnp.transpose(x_nchw, (0, 2, 3, 1)).astype(jnp.bfloat16)  # NCHW -> NHWC
    c61, c36 = params['feature_cache_idx']
    ci = params['predet_cache_idx']

    out, cache = darknet_forward(x, params['feature'], (c61, c36))
    r_tail1, r_tail2 = cache[c61], cache[c36]

    out, r_head1 = predet_forward(out, params['pre_det1'], ci)
    det1 = out

    up = upsample2(conv_layer(r_head1, params['up1']))
    out = jnp.concatenate([up, r_tail1], axis=-1)          # torch.cat(dim=1)

    out, r_head2 = predet_forward(out, params['pre_det2'], ci)
    det2 = out

    up = upsample2(conv_layer(r_head2, params['up2']))
    out = jnp.concatenate([up, r_tail2], axis=-1)

    out, _ = predet_forward(out, params['pre_det3'], ci)
    det3 = out

    to_nchw = lambda t: jnp.transpose(t, (0, 3, 1, 2)).astype(jnp.float32)
    return to_nchw(det1), to_nchw(det2), to_nchw(det3)


# ---------------------------------------------------------------------------
if __name__ == "__main__":
    key = jax.random.PRNGKey(0)
    pkey, xkey = jax.random.split(key)
    params = init_yolonet_params(pkey, numClass=80)

    # NCHW input, spatial dims must be divisible by 32 (5 stride-2 stages)
    x = jax.random.normal(xkey, (2, 3, 64, 64), jnp.float32)

    det1, det2, det3 = yolonet_forward(x, params)
    jax.block_until_ready((det1, det2, det3))

    assert det1.shape == (2, 255, 2, 2), det1.shape   # stride 32 head
    assert det2.shape == (2, 255, 4, 4), det2.shape   # stride 16 head
    assert det3.shape == (2, 255, 8, 8), det3.shape   # stride 8 head
    assert all(bool(jnp.isfinite(d).all()) for d in (det1, det2, det3))

    print("KERNEL_OK")
</pallas_src>

<mosaic_0001>
module attributes {stable_mosaic.version = 11 : i64} {
  func.func @_conv_kernel(%arg0: i32, %arg1: i32, %arg2: memref<1x66x66x3xbf16, #tpu.memory_space<vmem>>, %arg3: memref<9x3x32xbf16, #tpu.memory_space<vmem>>, %arg4: memref<1x32xf32, #tpu.memory_space<vmem>>, %arg5: memref<1x64x64x32xbf16, #tpu.memory_space<vmem>>) attributes {dimension_semantics = [#tpu.dimension_semantics<parallel>, #tpu.dimension_semantics<parallel>], iteration_bounds = array<i64: 2, 1>, scalar_prefetch = 0 : i64, scratch_operands = 0 : i64, tpu.core_type = #tpu.core_type<tc>, window_params = [{transform_indices = @transform_0, window_bounds = array<i64: 1, 66, 66, 3>}, {transform_indices = @transform_1, window_bounds = array<i64: 9, 3, 32>}, {transform_indices = @transform_2, window_bounds = array<i64: 1, 32>}, {transform_indices = @transform_3, window_bounds = array<i64: 1, 64, 64, 32>}]} {
    %c0 = arith.constant 0 : index
    %c0_0 = arith.constant 0 : index
    %0 = vector.load %arg4[%c0, %c0_0] : memref<1x32xf32, #tpu.memory_space<vmem>>, vector<1x32xf32>
    %c0_i32 = arith.constant 0 : i32
    %c64_i32 = arith.constant 64 : i32
    %1 = arith.addi %c0_i32, %c64_i32 : i32
    %c1_i32 = arith.constant 1 : i32
    scf.for %arg6 = %c0_i32 to %1 step %c1_i32  : i32 {
      %cst = arith.constant 0.000000e+00 : f32
      %2 = vector.broadcast %cst : f32 to vector<64x32xf32>
      %c0_i32_2 = arith.constant 0 : i32
      %3 = arith.addi %arg6, %c0_i32_2 : i32
      %c0_3 = arith.constant 0 : index
      %4 = arith.index_cast %3 : i32 to index
      %c0_4 = arith.constant 0 : index
      %c0_5 = arith.constant 0 : index
      %5 = vector.load %arg2[%c0_3, %4, %c0_4, %c0_5] : memref<1x66x66x3xbf16, #tpu.memory_space<vmem>>, vector<1x1x64x3xbf16>
      %6 = vector.shape_cast %5 : vector<1x1x64x3xbf16> to vector<64x3xbf16>
      %c0_6 = arith.constant 0 : index
      %c0_7 = arith.constant 0 : index
      %c0_8 = arith.constant 0 : index
      %7 = vector.load %arg3[%c0_6, %c0_7, %c0_8] : memref<9x3x32xbf16, #tpu.memory_space<vmem>>, vector<1x3x32xbf16>
      %8 = vector.shape_cast %7 : vector<1x3x32xbf16> to vector<3x32xbf16>
      %cst_9 = arith.constant dense<0.000000e+00> : vector<64x32xf32>
      %9 = tpu.matmul %6, %8, %cst_9 {dimension_numbers = #tpu.dot_dimension_numbers<[1], [0], [0], [1], [0, 0, 1, 1], [], []>} : vector<64x3xbf16>, vector<3x32xbf16>, vector<64x32xf32> -> vector<64x32xf32>
      %10 = arith.addf %2, %9 : vector<64x32xf32>
      %c0_i32_10 = arith.constant 0 : i32
      %11 = arith.addi %arg6, %c0_i32_10 : i32
      %c0_11 = arith.constant 0 : index
      %12 = arith.index_cast %11 : i32 to index
      %c1 = arith.constant 1 : index
      %c0_12 = arith.constant 0 : index
      %13 = vector.load %arg2[%c0_11, %12, %c1, %c0_12] : memref<1x66x66x3xbf16, #tpu.memory_space<vmem>>, vector<1x1x64x3xbf16>
      %14 = vector.shape_cast %13 : vector<1x1x64x3xbf16> to vector<64x3xbf16>
      %c1_13 = arith.constant 1 : index
      %c0_14 = arith.constant 0 : index
      %c0_15 = arith.constant 0 : index
      %15 = vector.load %arg3[%c1_13, %c0_14, %c0_15] : memref<9x3x32xbf16, #tpu.memory_space<vmem>>, vector<1x3x32xbf16>
      %16 = vector.shape_cast %15 : vector<1x3x32xbf16> to vector<3x32xbf16>
      %cst_16 = arith.constant dense<0.000000e+00> : vector<64x32xf32>
      %17 = tpu.matmul %14, %16, %cst_16 {dimension_numbers = #tpu.dot_dimension_numbers<[1], [0], [0], [1], [0, 0, 1, 1], [], []>} : vector<64x3xbf16>, vector<3x32xbf16>, vector<64x32xf32> -> vector<64x32xf32>
      %18 = arith.addf %10, %17 : vector<64x32xf32>
      %c0_i32_17 = arith.constant 0 : i32
      %19 = arith.addi %arg6, %c0_i32_17 : i32
      %c0_18 = arith.constant 0 : index
      %20 = arith.index_cast %19 : i32 to index
      %c2 = arith.constant 2 : index
      %c0_19 = arith.constant 0 : index
      %21 = vector.load %arg2[%c0_18, %20, %c2, %c0_19] : memref<1x66x66x3xbf16, #tpu.memory_space<vmem>>, vector<1x1x64x3xbf16>
      %22 = vector.shape_cast %21 : vector<1x1x64x3xbf16> to vector<64x3xbf16>
      %c2_20 = arith.constant 2 : index
      %c0_21 = arith.constant 0 : index
      %c0_22 = arith.constant 0 : index
      %23 = vector.load %arg3[%c2_20, %c0_21, %c0_22] : memref<9x3x32xbf16, #tpu.memory_space<vmem>>, vector<1x3x32xbf16>
      %24 = vector.shape_cast %23 : vector<1x3x32xbf16> to vector<3x32xbf16>
      %cst_23 = arith.constant dense<0.000000e+00> : vector<64x32xf32>
      %25 = tpu.matmul %22, %24, %cst_23 {dimension_numbers = #tpu.dot_dimension_numbers<[1], [0], [0], [1], [0, 0, 1, 1], [], []>} : vector<64x3xbf16>, vector<3x32xbf16>, vector<64x32xf32> -> vector<64x32xf32>
      %26 = arith.addf %18, %25 : vector<64x32xf32>
      %c1_i32_24 = arith.constant 1 : i32
      %27 = arith.addi %arg6, %c1_i32_24 : i32
      %c0_25 = arith.constant 0 : index
      %28 = arith.index_cast %27 : i32 to index
      %c0_26 = arith.constant 0 : index
      %c0_27 = arith.constant 0 : index
      %29 = vector.load %arg2[%c0_25, %28, %c0_26, %c0_27] : memref<1x66x66x3xbf16, #tpu.memory_space<vmem>>, vector<1x1x64x3xbf16>
      %30 = vector.shape_cast %29 : vector<1x1x64x3xbf16> to vector<64x3xbf16>
      %c3 = arith.constant 3 : index
      %c0_28 = arith.constant 0 : index
      %c0_29 = arith.constant 0 : index
      %31 = vector.load %arg3[%c3, %c0_28, %c0_29] : memref<9x3x32xbf16, #tpu.memory_space<vmem>>, vector<1x3x32xbf16>
      %32 = vector.shape_cast %31 : vector<1x3x32xbf16> to vector<3x32xbf16>
      %cst_30 = arith.constant dense<0.000000e+00> : vector<64x32xf32>
      %33 = tpu.matmul %30, %32, %cst_30 {dimension_numbers = #tpu.dot_dimension_numbers<[1], [0], [0], [1], [0, 0, 1, 1], [], []>} : vector<64x3xbf16>, vector<3x32xbf16>, vector<64x32xf32> -> vector<64x32xf32>
      %34 = arith.addf %26, %33 : vector<64x32xf32>
      %c1_i32_31 = arith.constant 1 : i32
      %35 = arith.addi %arg6, %c1_i32_31 : i32
      %c0_32 = arith.constant 0 : index
      %36 = arith.index_cast %35 : i32 to index
      %c1_33 = arith.constant 1 : index
      %c0_34 = arith.constant 0 : index
      %37 = vector.load %arg2[%c0_32, %36, %c1_33, %c0_34] : memref<1x66x66x3xbf16, #tpu.memory_space<vmem>>, vector<1x1x64x3xbf16>
      %38 = vector.shape_cast %37 : vector<1x1x64x3xbf16> to vector<64x3xbf16>
      %c4 = arith.constant 4 : index
      %c0_35 = arith.constant 0 : index
      %c0_36 = arith.constant 0 : index
      %39 = vector.load %arg3[%c4, %c0_35, %c0_36] : memref<9x3x32xbf16, #tpu.memory_space<vmem>>, vector<1x3x32xbf16>
      %40 = vector.shape_cast %39 : vector<1x3x32xbf16> to vector<3x32xbf16>
      %cst_37 = arith.constant dense<0.000000e+00> : vector<64x32xf32>
      %41 = tpu.matmul %38, %40, %cst_37 {dimension_numbers = #tpu.dot_dimension_numbers<[1], [0], [0], [1], [0, 0, 1, 1], [], []>} : vector<64x3xbf16>, vector<3x32xbf16>, vector<64x32xf32> -> vector<64x32xf32>
      %42 = arith.addf %34, %41 : vector<64x32xf32>
      %c1_i32_38 = arith.constant 1 : i32
      %43 = arith.addi %arg6, %c1_i32_38 : i32
      %c0_39 = arith.constant 0 : index
      %44 = arith.index_cast %43 : i32 to index
      %c2_40 = arith.constant 2 : index
      %c0_41 = arith.constant 0 : index
      %45 = vector.load %arg2[%c0_39, %44, %c2_40, %c0_41] : memref<1x66x66x3xbf16, #tpu.memory_space<vmem>>, vector<1x1x64x3xbf16>
      %46 = vector.shape_cast %45 : vector<1x1x64x3xbf16> to vector<64x3xbf16>
      %c5 = arith.constant 5 : index
      %c0_42 = arith.constant 0 : index
      %c0_43 = arith.constant 0 : index
      %47 = vector.load %arg3[%c5, %c0_42, %c0_43] : memref<9x3x32xbf16, #tpu.memory_space<vmem>>, vector<1x3x32xbf16>
      %48 = vector.shape_cast %47 : vector<1x3x32xbf16> to vector<3x32xbf16>
      %cst_44 = arith.constant dense<0.000000e+00> : vector<64x32xf32>
      %49 = tpu.matmul %46, %48, %cst_44 {dimension_numbers = #tpu.dot_dimension_numbers<[1], [0], [0], [1], [0, 0, 1, 1], [], []>} : vector<64x3xbf16>, vector<3x32xbf16>, vector<64x32xf32> -> vector<64x32xf32>
      %50 = arith.addf %42, %49 : vector<64x32xf32>
      %c2_i32 = arith.constant 2 : i32
      %51 = arith.addi %arg6, %c2_i32 : i32
      %c0_45 = arith.constant 0 : index
      %52 = arith.index_cast %51 : i32 to index
      %c0_46 = arith.constant 0 : index
      %c0_47 = arith.constant 0 : index
      %53 = vector.load %arg2[%c0_45, %52, %c0_46, %c0_47] : memref<1x66x66x3xbf16, #tpu.memory_space<vmem>>, vector<1x1x64x3xbf16>
      %54 = vector.shape_cast %53 : vector<1x1x64x3xbf16> to vector<64x3xbf16>
      %c6 = arith.constant 6 : index
      %c0_48 = arith.constant 0 : index
      %c0_49 = arith.constant 0 : index
      %55 = vector.load %arg3[%c6, %c0_48, %c0_49] : memref<9x3x32xbf16, #tpu.memory_space<vmem>>, vector<1x3x32xbf16>
      %56 = vector.shape_cast %55 : vector<1x3x32xbf16> to vector<3x32xbf16>
      %cst_50 = arith.constant dense<0.000000e+00> : vector<64x32xf32>
      %57 = tpu.matmul %54, %56, %cst_50 {dimension_numbers = #tpu.dot_dimension_numbers<[1], [0], [0], [1], [0, 0, 1, 1], [], []>} : vector<64x3xbf16>, vector<3x32xbf16>, vector<64x32xf32> -> vector<64x32xf32>
      %58 = arith.addf %50, %57 : vector<64x32xf32>
      %c2_i32_51 = arith.constant 2 : i32
      %59 = arith.addi %arg6, %c2_i32_51 : i32
      %c0_52 = arith.constant 0 : index
      %60 = arith.index_cast %59 : i32 to index
      %c1_53 = arith.constant 1 : index
      %c0_54 = arith.constant 0 : index
      %61 = vector.load %arg2[%c0_52, %60, %c1_53, %c0_54] : memref<1x66x66x3xbf16, #tpu.memory_space<vmem>>, vector<1x1x64x3xbf16>
      %62 = vector.shape_cast %61 : vector<1x1x64x3xbf16> to vector<64x3xbf16>
      %c7 = arith.constant 7 : index
      %c0_55 = arith.constant 0 : index
      %c0_56 = arith.constant 0 : index
      %63 = vector.load %arg3[%c7, %c0_55, %c0_56] : memref<9x3x32xbf16, #tpu.memory_space<vmem>>, vector<1x3x32xbf16>
      %64 = vector.shape_cast %63 : vector<1x3x32xbf16> to vector<3x32xbf16>
      %cst_57 = arith.constant dense<0.000000e+00> : vector<64x32xf32>
      %65 = tpu.matmul %62, %64, %cst_57 {dimension_numbers = #tpu.dot_dimension_numbers<[1], [0], [0], [1], [0, 0, 1, 1], [], []>} : vector<64x3xbf16>, vector<3x32xbf16>, vector<64x32xf32> -> vector<64x32xf32>
      %66 = arith.addf %58, %65 : vector<64x32xf32>
      %c2_i32_58 = arith.constant 2 : i32
      %67 = arith.addi %arg6, %c2_i32_58 : i32
      %c0_59 = arith.constant 0 : index
      %68 = arith.index_cast %67 : i32 to index
      %c2_60 = arith.constant 2 : index
      %c0_61 = arith.constant 0 : index
      %69 = vector.load %arg2[%c0_59, %68, %c2_60, %c0_61] : memref<1x66x66x3xbf16, #tpu.memory_space<vmem>>, vector<1x1x64x3xbf16>
      %70 = vector.shape_cast %69 : vector<1x1x64x3xbf16> to vector<64x3xbf16>
      %c8 = arith.constant 8 : index
      %c0_62 = arith.constant 0 : index
      %c0_63 = arith.constant 0 : index
      %71 = vector.load %arg3[%c8, %c0_62, %c0_63] : memref<9x3x32xbf16, #tpu.memory_space<vmem>>, vector<1x3x32xbf16>
      %72 = vector.shape_cast %71 : vector<1x3x32xbf16> to vector<3x32xbf16>
      %cst_64 = arith.constant dense<0.000000e+00> : vector<64x32xf32>
      %73 = tpu.matmul %70, %72, %cst_64 {dimension_numbers = #tpu.dot_dimension_numbers<[1], [0], [0], [1], [0, 0, 1, 1], [], []>} : vector<64x3xbf16>, vector<3x32xbf16>, vector<64x32xf32> -> vector<64x32xf32>
      %74 = arith.addf %66, %73 : vector<64x32xf32>
      %75 = vector.broadcast %0 : vector<1x32xf32> to vector<64x32xf32>
      %76 = arith.addf %74, %75 : vector<64x32xf32>
      %cst_65 = arith.constant 0.000000e+00 : f32
      %77 = vector.broadcast %cst_65 : f32 to vector<64x32xf32>
      %78 = arith.cmpf ogt, %76, %77 : vector<64x32xf32>
      %cst_66 = arith.constant 1.000000e-01 : f32
      %79 = vector.broadcast %cst_66 : f32 to vector<64x32xf32>
      %80 = arith.mulf %79, %76 : vector<64x32xf32>
      %81 = arith.select %78, %76, %80 : vector<64x32xi1>, vector<64x32xf32>
      %82 = arith.truncf %81 : vector<64x32xf32> to vector<64x32xbf16>
      %c0_67 = arith.constant 0 : index
      %83 = arith.index_cast %arg6 : i32 to index
      %c0_68 = arith.constant 0 : index
      %c0_69 = arith.constant 0 : index
      %84 = vector.load %arg5[%c0_67, %83, %c0_68, %c0_69] : memref<1x64x64x32xbf16, #tpu.memory_space<vmem>>, vector<1x1x64x32xbf16>
      %85 = vector.shape_cast %84 : vector<1x1x64x32xbf16> to vector<64x32xbf16>
      %86 = vector.shape_cast %82 : vector<64x32xbf16> to vector<1x1x64x32xbf16>
      tpu.vector_store %arg5[%c0_67, %83, %c0_68, %c0_69], %86 {strides = array<i32>} : memref<1x64x64x32xbf16, #tpu.memory_space<vmem>>, vector<1x1x64x32xbf16>,
    }
    %c64_i32_1 = arith.constant 64 : i32
    return
  }
  func.func @transform_0(%arg0: i32, %arg1: i32) -> (i32, i32, i32, i32) {
    %c0_i32 = arith.constant 0 : i32
    %c0_i32_0 = arith.constant 0 : i32
    %c0_i32_1 = arith.constant 0 : i32
    %c0_i32_2 = arith.constant 0 : i32
    return %arg0, %c0_i32, %c0_i32_0, %c0_i32_1 : i32, i32, i32, i32
  }
  func.func @transform_1(%arg0: i32, %arg1: i32) -> (i32, i32, i32) {
    %c0_i32 = arith.constant 0 : i32
    %c0_i32_0 = arith.constant 0 : i32
    %c0_i32_1 = arith.constant 0 : i32
    return %c0_i32, %c0_i32_0, %arg1 : i32, i32, i32
  }
  func.func @transform_2(%arg0: i32, %arg1: i32) -> (i32, i32) {
    %c0_i32 = arith.constant 0 : i32
    %c0_i32_0 = arith.constant 0 : i32
    return %c0_i32, %arg1 : i32, i32
  }
  func.func @transform_3(%arg0: i32, %arg1: i32) -> (i32, i32, i32, i32) {
    %c0_i32 = arith.constant 0 : i32
    %c0_i32_0 = arith.constant 0 : i32
    %c0_i32_1 = arith.constant 0 : i32
    return %arg0, %c0_i32, %c0_i32_0, %arg1 : i32, i32, i32, i32
  }
}

</mosaic_0001>

<llo_original>
// kernel: tpu_custom_call.1
$region0: #{tpu_custom_call.1}
  #allocation0 [shape = 'u32[]', space=smem, size = 0x4, offset = 0x4, fixed_abs, tag = 'smem constant byte address 0x4 - core index']
  #allocation1 [shape = 'u32[144,128]{1,0:T(1,128)}', space=vmem, size = 0x12000, scoped, tag = 'internal scratch']
  %s0 = inlined_call_operand.vmem [shape: bf16[2,66,66,3], index: 0, kind: input, shape index: {}]
  %s1 = inlined_call_operand.vmem [shape: bf16[9,3,32], index: 1, kind: input, shape index: {}]
  %s2 = inlined_call_operand.vmem [shape: f32[1,32], index: 2, kind: input, shape index: {}]
  %s3 = inlined_call_operand.vmem [shape: bf16[2,64,64,32], index: 3, kind: output, shape index: {}]
  %s4 = sld [smem:[#allocation0]]
  $region52: #{tpu_custom_call.1} parent=0
    _
  %s6 = ssub.s32 1, %s4
  %s7 = scalar_select 0, %s6, %s4
  loop: start=0, step=1, limit=4
  $region2: #{tpu_custom_call.1} parent=0 // loop_pre_header
    _
  $region3: #{tpu_custom_call.1} parent=0 // loop_header
    %s9 = sphi 0, %s13
    %p10 = scmp.ge.s32.totalorder %s9, 4
    %s16 = sphi 0, %s28
    %s17 = sphi 0, %s24
    %s18 = sphi 0, %s16
    %s19 = sphi 0, %s17
    %s20 = sphi 0, %s18
    %s21 = sphi 0, %s19
    %s31 = sphi 0, %s33
    %s34 = sphi 0, %s31
    %s35 = sphi 0, %s34
    %s51 = sphi 0, %s35
    %s57 = sphi 0, %s59
    %s60 = sphi 0, %s57
    %s61 = sphi 0, %s60
    %s77 = sphi 0, %s61
    %s83 = sphi 0, %s85
    %s86 = sphi 0, %s83
    %s87 = sphi 0, %s86
    %s103 = sphi 0, %s87
    %s111 = sphi 0, %s113
    %s114 = sphi 0, %s111
    %s115 = sphi 0, %s114
    %s131 = sphi 0, %s115
  $region4: #{tpu_custom_call.1} parent=0 // loop_header_branch
    %12 = sbr.rel (%p10) target = $region8
  $region5: #{tpu_custom_call.1} parent=0 // loop_body
    %s14 = ssub.s32 %s9, 1
    %s15 = ssub.s32 %s9, 2
    %s22 = sadd.s32 1, %s17
    %p23 = scmp.ge.s32.totalorder %s22, 1
    %s24 = scalar_select %p23, 0, %s22
    %s25 = sadd.s32 1, %s16
    %s26 = scalar_select %p23, %s25, %s16
    %p27 = scmp.ge.s32.totalorder %s26, 2
    %s28 = scalar_select %p27, 0, %s26
    %s29 = ssub.s32 %s16, %s28
    %p30 = scmp.eq.s32.totalorder %s29, 0
    %s32 = sadd.s32 %s31, 1
    %s33 = scalar_select %p30, %s31, %s32
    %p36 = pneg %p30
    %p37 = scmp.eq.s32.totalorder %s9, 1
    %p38 = por %p36, %p37
    %p39 = scmp.ne.s32.totalorder %s31, %s34
    %p40 = scmp.eq.s32.totalorder %s9, 0
    %p41 = por %p39, %p40
    %p42 = scmp.ne.s32.totalorder %s31, %s34
    %p43 = scmp.eq.s32.totalorder %s14, 1
    %p44 = por %p42, %p43
    %p45 = scmp.ne.s32.totalorder %s34, %s35
    %p46 = scmp.eq.s32.totalorder %s14, 0
    %p47 = por %p45, %p46
    %p48 = scmp.ne.s32.totalorder %s34, %s35
    %p49 = scmp.eq.s32.totalorder %s15, 1
    %p50 = por %p48, %p49
    %p52 = scmp.ne.s32.totalorder %s35, %s51
    %p53 = scmp.eq.s32.totalorder %s15, 0
    %p54 = por %p52, %p53
    %s55 = ssub.s32 %s17, %s24
    %p56 = scmp.eq.s32.totalorder %s55, 0
    %s58 = sadd.s32 %s57, 1
    %s59 = scalar_select %p56, %s57, %s58
    %p62 = pneg %p56
    %p63 = scmp.eq.s32.totalorder %s9, 1
    %p64 = por %p62, %p63
    %p65 = scmp.ne.s32.totalorder %s57, %s60
    %p66 = scmp.eq.s32.totalorder %s9, 0
    %p67 = por %p65, %p66
    %p68 = scmp.ne.s32.totalorder %s57, %s60
    %p69 = scmp.eq.s32.totalorder %s14, 1
    %p70 = por %p68, %p69
    %p71 = scmp.ne.s32.totalorder %s60, %s61
    %p72 = scmp.eq.s32.totalorder %s14, 0
    %p73 = por %p71, %p72
    %p74 = scmp.ne.s32.totalorder %s60, %s61
    %p75 = scmp.eq.s32.totalorder %s15, 1
    %p76 = por %p74, %p75
    %p78 = scmp.ne.s32.totalorder %s61, %s77
    %p79 = scmp.eq.s32.totalorder %s15, 0
    %p80 = por %p78, %p79
    %s81 = ssub.s32 %s17, %s24
    %p82 = scmp.eq.s32.totalorder %s81, 0
    %s84 = sadd.s32 %s83, 1
    %s85 = scalar_select %p82, %s83, %s84
    %p88 = pneg %p82
    %p89 = scmp.eq.s32.totalorder %s9, 1
    %p90 = por %p88, %p89
    %p91 = scmp.ne.s32.totalorder %s83, %s86
    %p92 = scmp.eq.s32.totalorder %s9, 0
    %p93 = por %p91, %p92
    %p94 = scmp.ne.s32.totalorder %s83, %s86
    %p95 = scmp.eq.s32.totalorder %s14, 1
    %p96 = por %p94, %p95
    %p97 = scmp.ne.s32.totalorder %s86, %s87
    %p98 = scmp.eq.s32.totalorder %s14, 0
    %p99 = por %p97, %p98
    %p100 = scmp.ne.s32.totalorder %s86, %s87
    %p101 = scmp.eq.s32.totalorder %s15, 1
    %p102 = por %p100, %p101
    %p104 = scmp.ne.s32.totalorder %s87, %s103
    %p105 = scmp.eq.s32.totalorder %s15, 0
    %p106 = por %p104, %p105
    %s107 = ssub.s32 %s16, %s28
    %s108 = ssub.s32 %s17, %s24
    %s109 = sor.u32 %s107, %s108
    %p110 = scmp.eq.s32.totalorder %s109, 0
    %s112 = sadd.s32 %s111, 1
    %s113 = scalar_select %p110, %s111, %s112
    %p116 = pneg %p110
    %p117 = scmp.eq.s32.totalorder %s9, 1
    %p118 = por %p116, %p117
    %p119 = scmp.ne.s32.totalorder %s111, %s114
    %p120 = scmp.eq.s32.totalorder %s9, 0
    %p121 = por %p119, %p120
    %p122 = scmp.ne.s32.totalorder %s111, %s114
    %p123 = scmp.eq.s32.totalorder %s14, 1
    %p124 = por %p122, %p123
    %p125 = scmp.ne.s32.totalorder %s114, %s115
    %p126 = scmp.eq.s32.totalorder %s14, 0
    %p127 = por %p125, %p126
    %p128 = scmp.ne.s32.totalorder %s114, %s115
    %p129 = scmp.eq.s32.totalorder %s15, 1
    %p130 = por %p128, %p129
    %p132 = scmp.ne.s32.totalorder %s115, %s131
    %p133 = scmp.eq.s32.totalorder %s15, 0
    %p134 = por %p132, %p133
    %p135 = scmp.le.s32.totalorder 1, %s9
    %p136 = scmp.lt.s32.totalorder %s9, 3
    %p137 = pnand %p135, %p136
    %p138 = pneg %p137
    // Predicated region
    $region9: #{tpu_custom_call.1} parent=5 // pred_check
      _
    $region10: #{tpu_custom_call.1} parent=5 // pred_check_branch
      %140 = sbr.rel (%p137) target = $region12
    $region11: #{tpu_custom_call.1} parent=5 // pred_region
      %s141 = ssub.s32 %s9, 1
      // Predicated region
      $region13: #{tpu_custom_call.1} parent=11 // pred_check
        %p142 = pneg %p73
      $region14: #{tpu_custom_call.1} parent=11 // pred_check_branch
        %144 = sbr.rel (%p142) target = $region16
      $region15: #{tpu_custom_call.1} parent=11 // pred_region
        %p145 = scmp.lt.s32.totalorder %s19, 0
        %s146 = scalar_select %p145, %s19, 0
        %s147 = smul.addr %s146, 2
        %s148 = scalar_lea.vmem %s1, %s147
      $region16: #{tpu_custom_call.1} parent=11 // pred_fallthru
        _
      // Predicated region
      $region17: #{tpu_custom_call.1} parent=11 // pred_check
        %p149 = pneg %p99
      $region18: #{tpu_custom_call.1} parent=11 // pred_check_branch
        %151 = sbr.rel (%p149) target = $region20
      $region19: #{tpu_custom_call.1} parent=11 // pred_region
        %p152 = scmp.lt.s32.totalorder %s19, 0
        %s153 = scalar_select %p152, %s19, 0
        %s154 = scalar_lea.vmem %s2, %s153
      $region20: #{tpu_custom_call.1} parent=11 // pred_fallthru
        _
    $region12: #{tpu_custom_call.1} parent=5 // pred_fallthru
      _
    %p155 = scmp.lt.s32.totalorder %s9, 2
    // Predicated region
    $region21: #{tpu_custom_call.1} parent=5 // pred_check
      %p156 = pneg %p155
    $region22: #{tpu_custom_call.1} parent=5 // pred_check_branch
      %158 = sbr.rel (%p156) target = $region24
    $region23: #{tpu_custom_call.1} parent=5 // pred_region
      // Predicated region
      $region25: #{tpu_custom_call.1} parent=23 // pred_check
        %p159 = pneg %p41
      $region26: #{tpu_custom_call.1} parent=23 // pred_check_branch
        %161 = sbr.rel (%p159) target = $region28
      $region27: #{tpu_custom_call.1} parent=23 // pred_region
        %p162 = scmp.lt.s32.totalorder %s16, 1
        %s163 = scalar_select %p162, %s16, 1
        %s164 = smul.addr %s163, 594
        %s165 = smul.addr %s164, 4
        %s166 = scalar_lea.vmem %s0, %s165
      $region28: #{tpu_custom_call.1} parent=23 // pred_fallthru
        _
    $region24: #{tpu_custom_call.1} parent=5 // pred_fallthru
      _
    %p167 = scmp.le.s32.totalorder 1, %s9
    %p168 = scmp.lt.s32.totalorder %s9, 3
    %p169 = pnand %p167, %p168
    %p170 = pneg %p169
    // Predicated region
    $region29: #{tpu_custom_call.1} parent=5 // pred_check
      _
    $region30: #{tpu_custom_call.1} parent=5 // pred_check_branch
      %172 = sbr.rel (%p169) target = $region32
    $region31: #{tpu_custom_call.1} parent=5 // pred_region
      %s173 = ssub.s32 %s9, 1
      %p174 = scmp.lt.s32.totalorder %s18, 1
      %s175 = scalar_select %p174, %s18, 1
      %s176 = smul.addr %s175, 594
      %s177 = smul.addr %s176, 4
      %s178 = scalar_lea.vmem %s0, %s177
      %p179 = pneg %p47
      %p180 = pneg %p44
      %p181 = scmp.lt.s32.totalorder %s19, 0
      %s182 = scalar_select %p181, %s19, 0
      %s183 = smul.addr %s182, 2
      %s184 = scalar_lea.vmem %s1, %s183
      %p185 = pneg %p73
      %p186 = pneg %p70
      %p187 = scmp.lt.s32.totalorder %s19, 0
      %s188 = scalar_select %p187, %s19, 0
      %s189 = scalar_lea.vmem %s2, %s188
      %p190 = pneg %p99
      %p191 = pneg %p96
      %p192 = pneg %p127
      %p193 = pneg %p124
      %p194 = scmp.lt.s32.totalorder %s18, 1
      %s195 = scalar_select %p194, %s18, 1
      %p196 = scmp.lt.s32.totalorder %s19, 0
      %s197 = scalar_select %p196, %s19, 0
      %s198 = smul.addr %s195, 512
      %s199 = sadd.s32 %s197, %s198
      %s200 = smul.addr %s199, 4
      %s201 = scalar_lea.vmem %s3, %s200
      %p202 = scmp.lt.s32.totalorder %s18, 1
      %s203 = scalar_select %p202, %s18, 1
      %s204 = smul.addr %s203, 594
      %s205 = smul.addr %s204, 4
      %s206 = scalar_lea.vmem %s0, %s205
      %p207 = scmp.lt.s32.totalorder %s19, 0
      %s208 = scalar_select %p207, %s19, 0
      %s209 = smul.addr %s208, 2
      %s210 = scalar_lea.vmem %s1, %s209
      %p211 = scmp.lt.s32.totalorder %s19, 0
      %s212 = scalar_select %p211, %s19, 0
      %s213 = scalar_lea.vmem %s2, %s212
      %p214 = scmp.lt.s32.totalorder %s18, 1
      %s215 = scalar_select %p214, %s18, 1
      %p216 = scmp.lt.s32.totalorder %s19, 0
      %s217 = scalar_select %p216, %s19, 0
      %s218 = smul.addr %s215, 512
      %s219 = sadd.s32 %s217, %s218
      %s220 = smul.addr %s219, 4
      %s221 = scalar_lea.vmem %s3, %s220
      %v223 = vld [vmem:[%s213] sm:$0x1]
      loop: start=0, step=1, limit=64
      $region33: #{tpu_custom_call.1} parent=31 // loop_pre_header
        _
      $region34: #{tpu_custom_call.1} parent=31 // loop_header
        %s225 = sphi 0, %s229
        %p226 = scmp.ge.s32.totalorder %s225, 64
      $region35: #{tpu_custom_call.1} parent=31 // loop_header_branch
        %228 = sbr.rel (%p226) target = $region39
      $region36: #{tpu_custom_call.1} parent=31 // loop_body
        %s230 = smul.u32 %s225, 9
        %s231 = smul.addr %s230, 4
        %s232 = scalar_lea.vmem %s206, %s231
        %v233 = vld [vmem:[%s232] sm:$0xf]
        %v234 = vld [vmem:[%s232 + $0x4] sm:$0xf]
        %v235 = vld [vmem:[%s232 + $0x8] sm:$0xf]
        %v236 = vld [vmem:[%s232 + $0xc] sm:$0xf]
        %v237 = vld [vmem:[%s232 + $0x10] sm:$0xf]
        %v238 = vld [vmem:[%s232 + $0x14] sm:$0xf]
        %v239 = vld [vmem:[%s232 + $0x18] sm:$0xf]
        %v240 = vld [vmem:[%s232 + $0x1c] sm:$0xf]
        %v241 = vld [vmem:[%s210] sm:$0x3]
        %v242 = vld [vmem:[%s232 + $0x20] sm:$0x1]
        %s243 = scalar_lea.vmem %s210, 2
        %v244 = vld [vmem:[%s243] sm:$0x3]
        %v254 = vunpack.c.l.b16 %v233
        %v255 = vunpack.c.l.b16 %v234
        %v256 = vunpack.c.l.b16 %v235
        %v257 = vunpack.c.l.b16 %v236
        %v258 = vunpack.c.l.b16 %v237
        %v259 = vunpack.c.l.b16 %v238
        %v260 = vunpack.c.l.b16 %v239
        %v261 = vunpack.c.l.b16 %v240
        %v262 = vunpack.c.l.b16 %v242
        %v263 = vpack.c.b16 %v255, %v254
        %v264 = vpack.c.b16 %v257, %v256
        %v265 = vpack.c.b16 %v259, %v258
        %v266 = vpack.c.b16 %v261, %v260
        %v267 = vpack.c.b16 %v262, %v262
        %vm268 = vsmask.f32 7424
        %v270 = vshrl.u32 %v263, 16
        %v272 = vshll.u32 %v263, 16
        %v274 = vrot.slane %v272, 1
        %v275 = vor.u32 %v270, %v274
        %v277 = vshll.u32 %v264, 16
        %v279 = vrot.slane %v277, 1
        %v280 = vsel %vm268, %v275, %v279
        %v281 = vshrl.u32 %v264, 16
        %v283 = vor.u32 %v281, %v279
        %v285 = vshll.u32 %v265, 16
        %v287 = vrot.slane %v285, 1
        %v288 = vsel %vm268, %v283, %v287
        %v289 = vshrl.u32 %v265, 16
        %v291 = vor.u32 %v289, %v287
        %v293 = vshll.u32 %v266, 16
        %v295 = vrot.slane %v293, 1
        %v296 = vsel %vm268, %v291, %v295
        %v297 = vshrl.u32 %v266, 16
        %v299 = vor.u32 %v297, %v295
        %v301 = vshll.u32 %v267, 16
        %v303 = vrot.slane %v301, 1
        %v304 = vsel %vm268, %v299, %v303
        %vm305 = vcmask 23552
        %v307 = vsel %vm305, %v280, 0
        %v310 = vsel %vm305, %v288, 0
        %v313 = vsel %vm305, %v296, 0
        %v316 = vsel %vm305, %v304, 0
        %vm318 = vcmask 1040384
        %vm319 = vcmask 1041408
        %v320 = vsel %vm318, 4294967295, 65535
        %v321 = vsel %vm319, %v320, 0
        %v323 = vand.u32 %v244, %v321
        %325 = vmatprep.subr.bf16.mxu0 0
        %326 = vmatpush1.bf16.msra.mxu0 %v323
        %327 = vmatprep.subr.bf16.mxu0 0
        %328 = vmatpush1.bf16.msra.mxu0 0
        %329 = vmatprep.subr.bf16.mxu0 0
        %330 = vmatpush1.bf16.msra.mxu0 0
        %331 = vmatprep.subr.bf16.mxu0 0
        %332 = vmatpush1.bf16.msra.mxu0 0
        %333 = vmatprep.subr.bf16.mxu0 0
        %334 = vmatpush1.bf16.msra.mxu0 0
        %335 = vmatprep.subr.bf16.mxu0 0
        %336 = vmatpush1.bf16.msra.mxu0 0
        %337 = vmatprep.subr.bf16.mxu0 0
        %338 = vmatpush1.bf16.msra.mxu0 0
        %339 = vmatprep.subr.bf16.mxu0 0
        %340 = vmatpush1.bf16.msra.mxu0 0
        %341 = vmatprep.subr.bf16.mxu0 0
        %342 = vmatpush1.bf16.msra.mxu0 0
        %343 = vmatprep.subr.bf16.mxu0 0
        %344 = vmatpush1.bf16.msra.mxu0 0
        %345 = vmatprep.subr.bf16.mxu0 0
        %346 = vmatpush1.bf16.msra.mxu0 0
        %347 = vmatprep.subr.bf16.mxu0 0
        %348 = vmatpush1.bf16.msra.mxu0 0
        %349 = vmatprep.subr.bf16.mxu0 0
        %350 = vmatpush1.bf16.msra.mxu0 0
        %351 = vmatprep.subr.bf16.mxu0 0
        %352 = vmatpush1.bf16.msra.mxu0 0
        %353 = vmatprep.subr.bf16.mxu0 0
        %354 = vmatpush1.bf16.msra.mxu0 0
        %355 = vmatprep.subr.bf16.mxu0 0
        %356 = vmatpush1.bf16.msra.mxu0 0
        %357 = vmatprep.mubr.bf16.mxu0 0
        %358 = vmatmul.mubr.bf16.gmra.mrb[0].mxu0 %v307
        %v359 = vpop.f32.mrb[0].mxu0
        %v360 = vadd.f32 0.0, %v359
        %v361 = vpop.f32.mrb[0].mxu0
        %v362 = vpop.f32.mrb[0].mxu0
        %v363 = vadd.f32 0.0, %v362
        %v364 = vpop.f32.mrb[0].mxu0
        %365 = vmatprep.mubr.bf16.mxu0 0
        %366 = vmatmul.mubr.bf16.gmra.mrb[0].mxu0 %v310
        %v367 = vpop.f32.mrb[0].mxu0
        %v368 = vadd.f32 0.0, %v367
        %v369 = vpop.f32.mrb[0].mxu0
        %v370 = vpop.f32.mrb[0].mxu0
        %v371 = vadd.f32 0.0, %v370
        %v372 = vpop.f32.mrb[0].mxu0
        %373 = vmatprep.mubr.bf16.mxu0 0
        %374 = vmatmul.mubr.bf16.gmra.mrb[0].mxu0 %v313
        %v375 = vpop.f32.mrb[0].mxu0
        %v376 = vadd.f32 0.0, %v375
        %v377 = vpop.f32.mrb[0].mxu0
        %v378 = vpop.f32.mrb[0].mxu0
        %v379 = vadd.f32 0.0, %v378
        %v380 = vpop.f32.mrb[0].mxu0
        %381 = vmatprep.mubr.bf16.mxu0 0
        %382 = vmatmul.mubr.bf16.gmra.mrb[0].mxu0 %v316
        %v383 = vpop.f32.mrb[0].mxu0
        %v384 = vadd.f32 0.0, %v383
        %v385 = vpop.f32.mrb[0].mxu0
        %v386 = vpop.f32.mrb[0].mxu0
        %v387 = vadd.f32 0.0, %v386
        %v388 = vpop.f32.mrb[0].mxu0
        %389 = vdwg.mxu0
        %v390 = vsel %vm305, %v263, 0
        %v392 = vsel %vm305, %v264, 0
        %v394 = vsel %vm305, %v265, 0
        %v396 = vsel %vm305, %v266, 0
        %v399 = vand.u32 %v241, %v321
        %401 = vmatprep.subr.bf16.mxu0 0
        %402 = vmatpush1.bf16.msra.mxu0 %v399
        %403 = vmatprep.subr.bf16.mxu0 0
        %404 = vmatpush1.bf16.msra.mxu0 0
        %405 = vmatprep.subr.bf16.mxu0 0
        %406 = vmatpush1.bf16.msra.mxu0 0
        %407 = vmatprep.subr.bf16.mxu0 0
        %408 = vmatpush1.bf16.msra.mxu0 0
        %409 = vmatprep.subr.bf16.mxu0 0
        %410 = vmatpush1.bf16.msra.mxu0 0
        %411 = vmatprep.subr.bf16.mxu0 0
        %412 = vmatpush1.bf16.msra.mxu0 0
        %413 = vmatprep.subr.bf16.mxu0 0
        %414 = vmatpush1.bf16.msra.mxu0 0
        %415 = vmatprep.subr.bf16.mxu0 0
        %416 = vmatpush1.bf16.msra.mxu0 0
        %417 = vmatprep.subr.bf16.mxu0 0
        %418 = vmatpush1.bf16.msra.mxu0 0
        %419 = vmatprep.subr.bf16.mxu0 0
        %420 = vmatpush1.bf16.msra.mxu0 0
        %421 = vmatprep.subr.bf16.mxu0 0
        %422 = vmatpush1.bf16.msra.mxu0 0
        %423 = vmatprep.subr.bf16.mxu0 0
        %424 = vmatpush1.bf16.msra.mxu0 0
        %425 = vmatprep.subr.bf16.mxu0 0
        %426 = vmatpush1.bf16.msra.mxu0 0
        %427 = vmatprep.subr.bf16.mxu0 0
        %428 = vmatpush1.bf16.msra.mxu0 0
        %429 = vmatprep.subr.bf16.mxu0 0
        %430 = vmatpush1.bf16.msra.mxu0 0
        %431 = vmatprep.subr.bf16.mxu0 0
        %432 = vmatpush1.bf16.msra.mxu0 0
        %433 = vmatprep.mubr.bf16.mxu0 0
        %434 = vmatmul.mubr.bf16.gmra.mrb[0].mxu0 %v390
        %v435 = vpop.f32.mrb[0].mxu0
        %v436 = vadd.f32 %v360, %v435
        %v437 = vpop.f32.mrb[0].mxu0
        %v438 = vpop.f32.mrb[0].mxu0
        %v439 = vadd.f32 %v363, %v438
        %v440 = vpop.f32.mrb[0].mxu0
        %441 = vmatprep.mubr.bf16.mxu0 0
        %442 = vmatmul.mubr.bf16.gmra.mrb[0].mxu0 %v392
        %v443 = vpop.f32.mrb[0].mxu0
        %v444 = vadd.f32 %v368, %v443
        %v445 = vpop.f32.mrb[0].mxu0
        %v446 = vpop.f32.mrb[0].mxu0
        %v447 = vadd.f32 %v371, %v446
        %v448 = vpop.f32.mrb[0].mxu0
        %449 = vmatprep.mubr.bf16.mxu0 0
        %450 = vmatmul.mubr.bf16.gmra.mrb[0].mxu0 %v394
        %v451 = vpop.f32.mrb[0].mxu0
        %v452 = vadd.f32 %v376, %v451
        %v453 = vpop.f32.mrb[0].mxu0
        %v454 = vpop.f32.mrb[0].mxu0
        %v455 = vadd.f32 %v379, %v454
        %v456 = vpop.f32.mrb[0].mxu0
        %457 = vmatprep.mubr.bf16.mxu0 0
        %458 = vmatmul.mubr.bf16.gmra.mrb[0].mxu0 %v396
        %v459 = vpop.f32.mrb[0].mxu0
        %v460 = vadd.f32 %v384, %v459
        %v461 = vpop.f32.mrb[0].mxu0
        %v462 = vpop.f32.mrb[0].mxu0
        %v463 = vadd.f32 %v387, %v462
        %v464 = vpop.f32.mrb[0].mxu0
        %465 = vdwg.mxu0
        %v466 = vld [vmem:[%s232] sm:$0xe]
        %s467 = scalar_lea.vmem %s210, 4
        %v468 = vld [vmem:[%s467] sm:$0x3]
        %v470 = vunpack.c.l.b16 %v466
        %v471 = vpack.c.b16 %v255, %v470
        %vm472 = vcmask 1046528
        %v473 = vrot.slane %v471, 1
        %v474 = vrot.slane %v264, 1
        %v475 = vsel %vm472, %v473, %v474
        %v476 = vrot.slane %v265, 1
        %v477 = vsel %vm472, %v474, %v476
        %v478 = vrot.slane %v266, 1
        %v479 = vsel %vm472, %v476, %v478
        %v480 = vrot.slane %v267, 1
        %v481 = vsel %vm472, %v478, %v480
        %v483 = vsel %vm305, %v475, 0
        %v486 = vsel %vm305, %v477, 0
        %v489 = vsel %vm305, %v479, 0
        %v492 = vsel %vm305, %v481, 0
        %v495 = vand.u32 %v468, %v321
        %497 = vmatprep.subr.bf16.mxu0 0
        %498 = vmatpush1.bf16.msra.mxu0 %v495
        %499 = vmatprep.subr.bf16.mxu0 0
        %500 = vmatpush1.bf16.msra.mxu0 0
        %501 = vmatprep.subr.bf16.mxu0 0
        %502 = vmatpush1.bf16.msra.mxu0 0
        %503 = vmatprep.subr.bf16.mxu0 0
        %504 = vmatpush1.bf16.msra.mxu0 0
        %505 = vmatprep.subr.bf16.mxu0 0
        %506 = vmatpush1.bf16.msra.mxu0 0
        %507 = vmatprep.subr.bf16.mxu0 0
        %508 = vmatpush1.bf16.msra.mxu0 0
        %509 = vmatprep.subr.bf16.mxu0 0
        %510 = vmatpush1.bf16.msra.mxu0 0
        %511 = vmatprep.subr.bf16.mxu0 0
        %512 = vmatpush1.bf16.msra.mxu0 0
        %513 = vmatprep.subr.bf16.mxu0 0
        %514 = vmatpush1.bf16.msra.mxu0 0
        %515 = vmatprep.subr.bf16.mxu0 0
        %516 = vmatpush1.bf16.msra.mxu0 0
        %517 = vmatprep.subr.bf16.mxu0 0
        %518 = vmatpush1.bf16.msra.mxu0 0
        %519 = vmatprep.subr.bf16.mxu0 0
        %520 = vmatpush1.bf16.msra.mxu0 0
        %521 = vmatprep.subr.bf16.mxu0 0
        %522 = vmatpush1.bf16.msra.mxu0 0
        %523 = vmatprep.subr.bf16.mxu0 0
        %524 = vmatpush1.bf16.msra.mxu0 0
        %525 = vmatprep.subr.bf16.mxu0 0
        %526 = vmatpush1.bf16.msra.mxu0 0
        %527 = vmatprep.subr.bf16.mxu0 0
        %528 = vmatpush1.bf16.msra.mxu0 0
        %529 = vmatprep.mubr.bf16.mxu0 0
        %530 = vmatmul.mubr.bf16.gmra.mrb[0].mxu0 %v483
        %v531 = vpop.f32.mrb[0].mxu0
        %v532 = vadd.f32 0.0, %v531
        %v533 = vpop.f32.mrb[0].mxu0
        %v534 = vpop.f32.mrb[0].mxu0
        %v535 = vadd.f32 0.0, %v534
        %v536 = vpop.f32.mrb[0].mxu0
        %537 = vmatprep.mubr.bf16.mxu0 0
        %538 = vmatmul.mubr.bf16.gmra.mrb[0].mxu0 %v486
        %v539 = vpop.f32.mrb[0].mxu0
        %v540 = vadd.f32 0.0, %v539
        %v541 = vpop.f32.mrb[0].mxu0
        %v542 = vpop.f32.mrb[0].mxu0
        %v543 = vadd.f32 0.0, %v542
        %v544 = vpop.f32.mrb[0].mxu0
        %545 = vmatprep.mubr.bf16.mxu0 0
        %546 = vmatmul.mubr.bf16.gmra.mrb[0].mxu0 %v489
        %v547 = vpop.f32.mrb[0].mxu0
        %v548 = vadd.f32 0.0, %v547
        %v549 = vpop.f32.mrb[0].mxu0
        %v550 = vpop.f32.mrb[0].mxu0
        %v551 = vadd.f32 0.0, %v550
        %v552 = vpop.f32.mrb[0].mxu0
        %553 = vmatprep.mubr.bf16.mxu0 0
        %554 = vmatmul.mubr.bf16.gmra.mrb[0].mxu0 %v492
        %v555 = vpop.f32.mrb[0].mxu0
        %v556 = vadd.f32 0.0, %v555
        %v557 = vpop.f32.mrb[0].mxu0
        %v558 = vpop.f32.mrb[0].mxu0
        %v559 = vadd.f32 0.0, %v558
        %v560 = vpop.f32.mrb[0].mxu0
        %561 = vdwg.mxu0
        %v562 = vadd.f32 %v436, %v532
        %v563 = vadd.f32 %v439, %v535
        %v564 = vadd.f32 %v444, %v540
        %v565 = vadd.f32 %v447, %v543
        %v566 = vadd.f32 %v452, %v548
        %v567 = vadd.f32 %v455, %v551
        %v568 = vadd.f32 %v460, %v556
        %v569 = vadd.f32 %v463, %v559
        %s570 = sadd.s32 %s225, 1
        %s571 = smul.u32 %s570, 9
        %s572 = smul.addr %s571, 4
        %s573 = scalar_lea.vmem %s206, %s572
        %v574 = vld [vmem:[%s573] sm:$0xf]
        %v575 = vld [vmem:[%s573 + $0x4] sm:$0xf]
        %v576 = vld [vmem:[%s573 + $0x8] sm:$0xf]
        %v577 = vld [vmem:[%s573 + $0xc] sm:$0xf]
        %v578 = vld [vmem:[%s573 + $0x10] sm:$0xf]
        %v579 = vld [vmem:[%s573 + $0x14] sm:$0xf]
        %v580 = vld [vmem:[%s573 + $0x18] sm:$0xf]
        %v581 = vld [vmem:[%s573 + $0x1c] sm:$0xf]
        %s582 = scalar_lea.vmem %s210, 6
        %v583 = vld [vmem:[%s582] sm:$0x3]
        %v592 = vunpack.c.l.b16 %v574
        %v593 = vunpack.c.l.b16 %v575
        %v594 = vunpack.c.l.b16 %v576
        %v595 = vunpack.c.l.b16 %v577
        %v596 = vunpack.c.l.b16 %v578
        %v597 = vunpack.c.l.b16 %v579
        %v598 = vunpack.c.l.b16 %v580
        %v599 = vunpack.c.l.b16 %v581
        %v600 = vpack.c.b16 %v593, %v592
        %v601 = vpack.c.b16 %v595, %v594
        %v602 = vpack.c.b16 %v597, %v596
        %v603 = vpack.c.b16 %v599, %v598
        %v605 = vsel %vm305, %v600, 0
        %v608 = vsel %vm305, %v601, 0
        %v611 = vsel %vm305, %v602, 0
        %v614 = vsel %vm305, %v603, 0
        %v617 = vand.u32 %v583, %v321
        %619 = vmatprep.subr.bf16.mxu0 0
        %620 = vmatpush1.bf16.msra.mxu0 %v617
        %621 = vmatprep.subr.bf16.mxu0 0
        %622 = vmatpush1.bf16.msra.mxu0 0
        %623 = vmatprep.subr.bf16.mxu0 0
        %624 = vmatpush1.bf16.msra.mxu0 0
        %625 = vmatprep.subr.bf16.mxu0 0
        %626 = vmatpush1.bf16.msra.mxu0 0
        %627 = vmatprep.subr.bf16.mxu0 0
        %628 = vmatpush1.bf16.msra.mxu0 0
        %629 = vmatprep.subr.bf16.mxu0 0
        %630 = vmatpush1.bf16.msra.mxu0 0
        %631 = vmatprep.subr.bf16.mxu0 0
        %632 = vmatpush1.bf16.msra.mxu0 0
        %633 = vmatprep.subr.bf16.mxu0 0
        %634 = vmatpush1.bf16.msra.mxu0 0
        %635 = vmatprep.subr.bf16.mxu0 0
        %636 = vmatpush1.bf16.msra.mxu0 0
        %637 = vmatprep.subr.bf16.mxu0 0
        %638 = vmatpush1.bf16.msra.mxu0 0
        %639 = vmatprep.subr.bf16.mxu0 0
        %640 = vmatpush1.bf16.msra.mxu0 0
        %641 = vmatprep.subr.bf16.mxu0 0
        %642 = vmatpush1.bf16.msra.mxu0 0
        %643 = vmatprep.subr.bf16.mxu0 0
        %644 = vmatpush1.bf16.msra.mxu0 0
        %645 = vmatprep.subr.bf16.mxu0 0
        %646 = vmatpush1.bf16.msra.mxu0 0
        %647 = vmatprep.subr.bf16.mxu0 0
        %648 = vmatpush1.bf16.msra.mxu0 0
        %649 = vmatprep.subr.bf16.mxu0 0
        %650 = vmatpush1.bf16.msra.mxu0 0
        %651 = vmatprep.mubr.bf16.mxu0 0
        %652 = vmatmul.mubr.bf16.gmra.mrb[0].mxu0 %v605
        %v653 = vpop.f32.mrb[0].mxu0
        %v654 = vadd.f32 0.0, %v653
        %v655 = vpop.f32.mrb[0].mxu0
        %v656 = vpop.f32.mrb[0].mxu0
        %v657 = vadd.f32 0.0, %v656
        %v658 = vpop.f32.mrb[0].mxu0
        %659 = vmatprep.mubr.bf16.mxu0 0
        %660 = vmatmul.mubr.bf16.gmra.mrb[0].mxu0 %v608
        %v661 = vpop.f32.mrb[0].mxu0
        %v662 = vadd.f32 0.0, %v661
        %v663 = vpop.f32.mrb[0].mxu0
        %v664 = vpop.f32.mrb[0].mxu0
        %v665 = vadd.f32 0.0, %v664
        %v666 = vpop.f32.mrb[0].mxu0
        %667 = vmatprep.mubr.bf16.mxu0 0
        %668 = vmatmul.mubr.bf16.gmra.mrb[0].mxu0 %v611
        %v669 = vpop.f32.mrb[0].mxu0
        %v670 = vadd.f32 0.0, %v669
        %v671 = vpop.f32.mrb[0].mxu0
        %v672 = vpop.f32.mrb[0].mxu0
        %v673 = vadd.f32 0.0, %v672
        %v674 = vpop.f32.mrb[0].mxu0
        %675 = vmatprep.mubr.bf16.mxu0 0
        %676 = vmatmul.mubr.bf16.gmra.mrb[0].mxu0 %v614
        %v677 = vpop.f32.mrb[0].mxu0
        %v678 = vadd.f32 0.0, %v677
        %v679 = vpop.f32.mrb[0].mxu0
        %v680 = vpop.f32.mrb[0].mxu0
        %v681 = vadd.f32 0.0, %v680
        %v682 = vpop.f32.mrb[0].mxu0
        %683 = vdwg.mxu0
        %v684 = vadd.f32 %v562, %v654
        %v685 = vadd.f32 %v563, %v657
        %v686 = vadd.f32 %v564, %v662
        %v687 = vadd.f32 %v565, %v665
        %v688 = vadd.f32 %v566, %v670
        %v689 = vadd.f32 %v567, %v673
        %v690 = vadd.f32 %v568, %v678
        %v691 = vadd.f32 %v569, %v681
        %v692 = vld [vmem:[%s573] sm:$0xf]
        %v693 = vld [vmem:[%s573 + $0x4] sm:$0xf]
        %v694 = vld [vmem:[%s573 + $0x8] sm:$0xf]
        %v695 = vld [vmem:[%s573 + $0xc] sm:$0xf]
        %v696 = vld [vmem:[%s573 + $0x10] sm:$0xf]
        %v697 = vld [vmem:[%s573 + $0x14] sm:$0xf]
        %v698 = vld [vmem:[%s573 + $0x18] sm:$0xf]
        %v699 = vld [vmem:[%s573 + $0x1c] sm:$0xf]
        %v700 = vld [vmem:[%s573 + $0x20] sm:$0x1]
        %s701 = scalar_lea.vmem %s210, 8
        %v702 = vld [vmem:[%s701] sm:$0x3]
        %v712 = vunpack.c.l.b16 %v692
        %v713 = vunpack.c.l.b16 %v693
        %v714 = vunpack.c.l.b16 %v694
        %v715 = vunpack.c.l.b16 %v695
        %v716 = vunpack.c.l.b16 %v696
        %v717 = vunpack.c.l.b16 %v697
        %v718 = vunpack.c.l.b16 %v698
        %v719 = vunpack.c.l.b16 %v699
        %v720 = vunpack.c.l.b16 %v700
        %v721 = vpack.c.b16 %v713, %v712
        %v722 = vpack.c.b16 %v715, %v714
        %v723 = vpack.c.b16 %v717, %v716
        %v724 = vpack.c.b16 %v719, %v718
        %v725 = vpack.c.b16 %v720, %v720
        %v727 = vshrl.u32 %v721, 16
        %v729 = vshll.u32 %v721, 16
        %v731 = vrot.slane %v729, 1
        %v732 = vor.u32 %v727, %v731
        %v734 = vshll.u32 %v722, 16
        %v736 = vrot.slane %v734, 1
        %v737 = vsel %vm268, %v732, %v736
        %v738 = vshrl.u32 %v722, 16
        %v740 = vor.u32 %v738, %v736
        %v742 = vshll.u32 %v723, 16
        %v744 = vrot.slane %v742, 1
        %v745 = vsel %vm268, %v740, %v744
        %v746 = vshrl.u32 %v723, 16
        %v748 = vor.u32 %v746, %v744
        %v750 = vshll.u32 %v724, 16
        %v752 = vrot.slane %v750, 1
        %v753 = vsel %vm268, %v748, %v752
        %v754 = vshrl.u32 %v724, 16
        %v756 = vor.u32 %v754, %v752
        %v758 = vshll.u32 %v725, 16
        %v760 = vrot.slane %v758, 1
        %v761 = vsel %vm268, %v756, %v760
        %v763 = vsel %vm305, %v737, 0
        %v766 = vsel %vm305, %v745, 0
        %v769 = vsel %vm305, %v753, 0
        %v772 = vsel %vm305, %v761, 0
        %v775 = vand.u32 %v702, %v321
        %777 = vmatprep.subr.bf16.mxu0 0
        %778 = vmatpush1.bf16.msra.mxu0 %v775
        %779 = vmatprep.subr.bf16.mxu0 0
        %780 = vmatpush1.bf16.msra.mxu0 0
        %781 = vmatprep.subr.bf16.mxu0 0
        %782 = vmatpush1.bf16.msra.mxu0 0
        %783 = vmatprep.subr.bf16.mxu0 0
        %784 = vmatpush1.bf16.msra.mxu0 0
        %785 = vmatprep.subr.bf16.mxu0 0
        %786 = vmatpush1.bf16.msra.mxu0 0
        %787 = vmatprep.subr.bf16.mxu0 0
        %788 = vmatpush1.bf16.msra.mxu0 0
        %789 = vmatprep.subr.bf16.mxu0 0
        %790 = vmatpush1.bf16.msra.mxu0 0
        %791 = vmatprep.subr.bf16.mxu0 0
        %792 = vmatpush1.bf16.msra.mxu0 0
        %793 = vmatprep.subr.bf16.mxu0 0
        %794 = vmatpush1.bf16.msra.mxu0 0
        %795 = vmatprep.subr.bf16.mxu0 0
        %796 = vmatpush1.bf16.msra.mxu0 0
        %797 = vmatprep.subr.bf16.mxu0 0
        %798 = vmatpush1.bf16.msra.mxu0 0
        %799 = vmatprep.subr.bf16.mxu0 0
        %800 = vmatpush1.bf16.msra.mxu0 0
        %801 = vmatprep.subr.bf16.mxu0 0
        %802 = vmatpush1.bf16.msra.mxu0 0
        %803 = vmatprep.subr.bf16.mxu0 0
        %804 = vmatpush1.bf16.msra.mxu0 0
        %805 = vmatprep.subr.bf16.mxu0 0
        %806 = vmatpush1.bf16.msra.mxu0 0
        %807 = vmatprep.subr.bf16.mxu0 0
        %808 = vmatpush1.bf16.msra.mxu0 0
        %809 = vmatprep.mubr.bf16.mxu0 0
        %810 = vmatmul.mubr.bf16.gmra.mrb[0].mxu0 %v763
        %v811 = vpop.f32.mrb[0].mxu0
        %v812 = vadd.f32 0.0, %v811
        %v813 = vpop.f32.mrb[0].mxu0
        %v814 = vpop.f32.mrb[0].mxu0
        %v815 = vadd.f32 0.0, %v814
        %v816 = vpop.f32.mrb[0].mxu0
        %817 = vmatprep.mubr.bf16.mxu0 0
        %818 = vmatmul.mubr.bf16.gmra.mrb[0].mxu0 %v766
        %v819 = vpop.f32.mrb[0].mxu0
        %v820 = vadd.f32 0.0, %v819
        %v821 = vpop.f32.mrb[0].mxu0
        %v822 = vpop.f32.mrb[0].mxu0
        %v823 = vadd.f32 0.0, %v822
        %v824 = vpop.f32.mrb[0].mxu0
        %825 = vmatprep.mubr.bf16.mxu0 0
        %826 = vmatmul.mubr.bf16.gmra.mrb[0].mxu0 %v769
        %v827 = vpop.f32.mrb[0].mxu0
        %v828 = vadd.f32 0.0, %v827
        %v829 = vpop.f32.mrb[0].mxu0
        %v830 = vpop.f32.mrb[0].mxu0
        %v831 = vadd.f32 0.0, %v830
        %v832 = vpop.f32.mrb[0].mxu0
        %833 = vmatprep.mubr.bf16.mxu0 0
        %834 = vmatmul.mubr.bf16.gmra.mrb[0].mxu0 %v772
        %v835 = vpop.f32.mrb[0].mxu0
        %v836 = vadd.f32 0.0, %v835
        %v837 = vpop.f32.mrb[0].mxu0
        %v838 = vpop.f32.mrb[0].mxu0
        %v839 = vadd.f32 0.0, %v838
        %v840 = vpop.f32.mrb[0].mxu0
        %841 = vdwg.mxu0
        %v842 = vadd.f32 %v684, %v812
        %v843 = vadd.f32 %v685, %v815
        %v844 = vadd.f32 %v686, %v820
        %v845 = vadd.f32 %v687, %v823
        %v846 = vadd.f32 %v688, %v828
        %v847 = vadd.f32 %v689, %v831
        %v848 = vadd.f32 %v690, %v836
        %v849 = vadd.f32 %v691, %v839
        %v850 = vld [vmem:[%s573] sm:$0xe]
        %s851 = scalar_lea.vmem %s210, 10
        %v852 = vld [vmem:[%s851] sm:$0x3]
        %v854 = vunpack.c.l.b16 %v850
        %v855 = vpack.c.b16 %v713, %v854
        %v856 = vrot.slane %v855, 1
        %v857 = vrot.slane %v722, 1
        %v858 = vsel %vm472, %v856, %v857
        %v859 = vrot.slane %v723, 1
        %v860 = vsel %vm472, %v857, %v859
        %v861 = vrot.slane %v724, 1
        %v862 = vsel %vm472, %v859, %v861
        %v863 = vrot.slane %v725, 1
        %v864 = vsel %vm472, %v861, %v863
        %v866 = vsel %vm305, %v858, 0
        %v869 = vsel %vm305, %v860, 0
        %v872 = vsel %vm305, %v862, 0
        %v875 = vsel %vm305, %v864, 0
        %v878 = vand.u32 %v852, %v321
        %880 = vmatprep.subr.bf16.mxu0 0
        %881 = vmatpush1.bf16.msra.mxu0 %v878
        %882 = vmatprep.subr.bf16.mxu0 0
        %883 = vmatpush1.bf16.msra.mxu0 0
        %884 = vmatprep.subr.bf16.mxu0 0
        %885 = vmatpush1.bf16.msra.mxu0 0
        %886 = vmatprep.subr.bf16.mxu0 0
        %887 = vmatpush1.bf16.msra.mxu0 0
        %888 = vmatprep.subr.bf16.mxu0 0
        %889 = vmatpush1.bf16.msra.mxu0 0
        %890 = vmatprep.subr.bf16.mxu0 0
        %891 = vmatpush1.bf16.msra.mxu0 0
        %892 = vmatprep.subr.bf16.mxu0 0
        %893 = vmatpush1.bf16.msra.mxu0 0
        %894 = vmatprep.subr.bf16.mxu0 0
        %895 = vmatpush1.bf16.msra.mxu0 0
        %896 = vmatprep.subr.bf16.mxu0 0
        %897 = vmatpush1.bf16.msra.mxu0 0
        %898 = vmatprep.subr.bf16.mxu0 0
        %899 = vmatpush1.bf16.msra.mxu0 0
        %900 = vmatprep.subr.bf16.mxu0 0
        %901 = vmatpush1.bf16.msra.mxu0 0
        %902 = vmatprep.subr.bf16.mxu0 0
        %903 = vmatpush1.bf16.msra.mxu0 0
        %904 = vmatprep.subr.bf16.mxu0 0
        %905 = vmatpush1.bf16.msra.mxu0 0
        %906 = vmatprep.subr.bf16.mxu0 0
        %907 = vmatpush1.bf16.msra.mxu0 0
        %908 = vmatprep.subr.bf16.mxu0 0
        %909 = vmatpush1.bf16.msra.mxu0 0
        %910 = vmatprep.subr.bf16.mxu0 0
        %911 = vmatpush1.bf16.msra.mxu0 0
        %912 = vmatprep.mubr.bf16.mxu0 0
        %913 = vmatmul.mubr.bf16.gmra.mrb[0].mxu0 %v866
        %v914 = vpop.f32.mrb[0].mxu0
        %v915 = vadd.f32 0.0, %v914
        %v916 = vpop.f32.mrb[0].mxu0
        %v917 = vpop.f32.mrb[0].mxu0
        %v918 = vadd.f32 0.0, %v917
        %v919 = vpop.f32.mrb[0].mxu0
        %920 = vmatprep.mubr.bf16.mxu0 0
        %921 = vmatmul.mubr.bf16.gmra.mrb[0].mxu0 %v869
        %v922 = vpop.f32.mrb[0].mxu0
        %v923 = vadd.f32 0.0, %v922
        %v924 = vpop.f32.mrb[0].mxu0
        %v925 = vpop.f32.mrb[0].mxu0
        %v926 = vadd.f32 0.0, %v925
        %v927 = vpop.f32.mrb[0].mxu0
        %928 = vmatprep.mubr.bf16.mxu0 0
        %929 = vmatmul.mubr.bf16.gmra.mrb[0].mxu0 %v872
        %v930 = vpop.f32.mrb[0].mxu0
        %v931 = vadd.f32 0.0, %v930
        %v932 = vpop.f32.mrb[0].mxu0
        %v933 = vpop.f32.mrb[0].mxu0
        %v934 = vadd.f32 0.0, %v933
        %v935 = vpop.f32.mrb[0].mxu0
        %936 = vmatprep.mubr.bf16.mxu0 0
        %937 = vmatmul.mubr.bf16.gmra.mrb[0].mxu0 %v875
        %v938 = vpop.f32.mrb[0].mxu0
        %v939 = vadd.f32 0.0, %v938
        %v940 = vpop.f32.mrb[0].mxu0
        %v941 = vpop.f32.mrb[0].mxu0
        %v942 = vadd.f32 0.0, %v941
        %v943 = vpop.f32.mrb[0].mxu0
        %944 = vdwg.mxu0
        %v945 = vadd.f32 %v842, %v915
        %v946 = vadd.f32 %v843, %v918
        %v947 = vadd.f32 %v844, %v923
        %v948 = vadd.f32 %v845, %v926
        %v949 = vadd.f32 %v846, %v931
        %v950 = vadd.f32 %v847, %v934
        %v951 = vadd.f32 %v848, %v939
        %v952 = vadd.f32 %v849, %v942
        %s953 = sadd.s32 %s225, 2
        %s954 = smul.u32 %s953, 9
        %s955 = smul.addr %s954, 4
        %s956 = scalar_lea.vmem %s206, %s955
        %v957 = vld [vmem:[%s956] sm:$0xf]
        %v958 = vld [vmem:[%s956 + $0x4] sm:$0xf]
        %v959 = vld [vmem:[%s956 + $0x8] sm:$0xf]
        %v960 = vld [vmem:[%s956 + $0xc] sm:$0xf]
        %v961 = vld [vmem:[%s956 + $0x10] sm:$0xf]
        %v962 = vld [vmem:[%s956 + $0x14] sm:$0xf]
        %v963 = vld [vmem:[%s956 + $0x18] sm:$0xf]
        %v964 = vld [vmem:[%s956 + $0x1c] sm:$0xf]
        %s965 = scalar_lea.vmem %s210, 12
        %v966 = vld [vmem:[%s965] sm:$0x3]
        %v975 = vunpack.c.l.b16 %v957
        %v976 = vunpack.c.l.b16 %v958
        %v977 = vunpack.c.l.b16 %v959
        %v978 = vunpack.c.l.b16 %v960
        %v979 = vunpack.c.l.b16 %v961
        %v980 = vunpack.c.l.b16 %v962
        %v981 = vunpack.c.l.b16 %v963
        %v982 = vunpack.c.l.b16 %v964
        %v983 = vpack.c.b16 %v976, %v975
        %v984 = vpack.c.b16 %v978, %v977
        %v985 = vpack.c.b16 %v980, %v979
        %v986 = vpack.c.b16 %v982, %v981
        %v988 = vsel %vm305, %v983, 0
        %v991 = vsel %vm305, %v984, 0
        %v994 = vsel %vm305, %v985, 0
        %v997 = vsel %vm305, %v986, 0
        %v1000 = vand.u32 %v966, %v321
        %1002 = vmatprep.subr.bf16.mxu0 0
        %1003 = vmatpush1.bf16.msra.mxu0 %v1000
        %1004 = vmatprep.subr.bf16.mxu0 0
        %1005 = vmatpush1.bf16.msra.mxu0 0
        %1006 = vmatprep.subr.bf16.mxu0 0
        %1007 = vmatpush1.bf16.msra.mxu0 0
        %1008 = vmatprep.subr.bf16.mxu0 0
        %1009 = vmatpush1.bf16.msra.mxu0 0
        %1010 = vmatprep.subr.bf16.mxu0 0
        %1011 = vmatpush1.bf16.msra.mxu0 0
        %1012 = vmatprep.subr.bf16.mxu0 0
        %1013 = vmatpush1.bf16.msra.mxu0 0
        %1014 = vmatprep.subr.bf16.mxu0 0
        %1015 = vmatpush1.bf16.msra.mxu0 0
        %1016 = vmatprep.subr.bf16.mxu0 0
        %1017 = vmatpush1.bf16.msra.mxu0 0
        %1018 = vmatprep.subr.bf16.mxu0 0
        %1019 = vmatpush1.bf16.msra.mxu0 0
        %1020 = vmatprep.subr.bf16.mxu0 0
        %1021 = vmatpush1.bf16.msra.mxu0 0
        %1022 = vmatprep.subr.bf16.mxu0 0
        %1023 = vmatpush1.bf16.msra.mxu0 0
        %1024 = vmatprep.subr.bf16.mxu0 0
        %1025 = vmatpush1.bf16.msra.mxu0 0
        %1026 = vmatprep.subr.bf16.mxu0 0
        %1027 = vmatpush1.bf16.msra.mxu0 0
        %1028 = vmatprep.subr.bf16.mxu0 0
        %1029 = vmatpush1.bf16.msra.mxu0 0
        %1030 = vmatprep.subr.bf16.mxu0 0
        %1031 = vmatpush1.bf16.msra.mxu0 0
        %1032 = vmatprep.subr.bf16.mxu0 0
        %1033 = vmatpush1.bf16.msra.mxu0 0
        %1034 = vmatprep.mubr.bf16.mxu0 0
        %1035 = vmatmul.mubr.bf16.gmra.mrb[0].mxu0 %v988
        %v1036 = vpop.f32.mrb[0].mxu0
        %v1037 = vadd.f32 0.0, %v1036
        %v1038 = vpop.f32.mrb[0].mxu0
        %v1039 = vpop.f32.mrb[0].mxu0
        %v1040 = vadd.f32 0.0, %v1039
        %v1041 = vpop.f32.mrb[0].mxu0
        %1042 = vmatprep.mubr.bf16.mxu0 0
        %1043 = vmatmul.mubr.bf16.gmra.mrb[0].mxu0 %v991
        %v1044 = vpop.f32.mrb[0].mxu0
        %v1045 = vadd.f32 0.0, %v1044
        %v1046 = vpop.f32.mrb[0].mxu0
        %v1047 = vpop.f32.mrb[0].mxu0
        %v1048 = vadd.f32 0.0, %v1047
        %v1049 = vpop.f32.mrb[0].mxu0
        %1050 = vmatprep.mubr.bf16.mxu0 0
        %1051 = vmatmul.mubr.bf16.gmra.mrb[0].mxu0 %v994
        %v1052 = vpop.f32.mrb[0].mxu0
        %v1053 = vadd.f32 0.0, %v1052
        %v1054 = vpop.f32.mrb[0].mxu0
        %v1055 = vpop.f32.mrb[0].mxu0
        %v1056 = vadd.f32 0.0, %v1055
        %v1057 = vpop.f32.mrb[0].mxu0
        %1058 = vmatprep.mubr.bf16.mxu0 0
        %1059 = vmatmul.mubr.bf16.gmra.mrb[0].mxu0 %v997
        %v1060 = vpop.f32.mrb[0].mxu0
        %v1061 = vadd.f32 0.0, %v1060
        %v1062 = vpop.f32.mrb[0].mxu0
        %v1063 = vpop.f32.mrb[0].mxu0
        %v1064 = vadd.f32 0.0, %v1063
        %v1065 = vpop.f32.mrb[0].mxu0
        %1066 = vdwg.mxu0
        %v1067 = vadd.f32 %v945, %v1037
        %v1068 = vadd.f32 %v946, %v1040
        %v1069 = vadd.f32 %v947, %v1045
        %v1070 = vadd.f32 %v948, %v1048
        %v1071 = vadd.f32 %v949, %v1053
        %v1072 = vadd.f32 %v950, %v1056
        %v1073 = vadd.f32 %v951, %v1061
        %v1074 = vadd.f32 %v952, %v1064
        %v1075 = vld [vmem:[%s956] sm:$0xf]
        %v1076 = vld [vmem:[%s956 + $0x4] sm:$0xf]
        %v1077 = vld [vmem:[%s956 + $0x8] sm:$0xf]
        %v1078 = vld [vmem:[%s956 + $0xc] sm:$0xf]
        %v1079 = vld [vmem:[%s956 + $0x10] sm:$0xf]
        %v1080 = vld [vmem:[%s956 + $0x14] sm:$0xf]
        %v1081 = vld [vmem:[%s956 + $0x18] sm:$0xf]
        %v1082 = vld [vmem:[%s956 + $0x1c] sm:$0xf]
        %v1083 = vld [vmem:[%s956 + $0x20] sm:$0x1]
        %s1084 = scalar_lea.vmem %s210, 14
        %v1085 = vld [vmem:[%s1084] sm:$0x3]
        %v1095 = vunpack.c.l.b16 %v1075
        %v1096 = vunpack.c.l.b16 %v1076
        %v1097 = vunpack.c.l.b16 %v1077
        %v1098 = vunpack.c.l.b16 %v1078
        %v1099 = vunpack.c.l.b16 %v1079
        %v1100 = vunpack.c.l.b16 %v1080
        %v1101 = vunpack.c.l.b16 %v1081
        %v1102 = vunpack.c.l.b16 %v1082
        %v1103 = vunpack.c.l.b16 %v1083
        %v1104 = vpack.c.b16 %v1096, %v1095
        %v1105 = vpack.c.b16 %v1098, %v1097
        %v1106 = vpack.c.b16 %v1100, %v1099
        %v1107 = vpack.c.b16 %v1102, %v1101
        %v1108 = vpack.c.b16 %v1103, %v1103
        %v1110 = vshrl.u32 %v1104, 16
        %v1112 = vshll.u32 %v1104, 16
        %v1114 = vrot.slane %v1112, 1
        %v1115 = vor.u32 %v1110, %v1114
        %v1117 = vshll.u32 %v1105, 16
        %v1119 = vrot.slane %v1117, 1
        %v1120 = vsel %vm268, %v1115, %v1119
        %v1121 = vshrl.u32 %v1105, 16
        %v1123 = vor.u32 %v1121, %v1119
        %v1125 = vshll.u32 %v1106, 16
        %v1127 = vrot.slane %v1125, 1
        %v1128 = vsel %vm268, %v1123, %v1127
        %v1129 = vshrl.u32 %v1106, 16
        %v1131 = vor.u32 %v1129, %v1127
        %v1133 = vshll.u32 %v1107, 16
        %v1135 = vrot.slane %v1133, 1
        %v1136 = vsel %vm268, %v1131, %v1135
        %v1137 = vshrl.u32 %v1107, 16
        %v1139 = vor.u32 %v1137, %v1135
        %v1141 = vshll.u32 %v1108, 16
        %v1143 = vrot.slane %v1141, 1
        %v1144 = vsel %vm268, %v1139, %v1143
        %v1146 = vsel %vm305, %v1120, 0
        %v1149 = vsel %vm305, %v1128, 0
        %v1152 = vsel %vm305, %v1136, 0
        %v1155 = vsel %vm305, %v1144, 0
        %v1158 = vand.u32 %v1085, %v321
        %1160 = vmatprep.subr.bf16.mxu0 0
        %1161 = vmatpush1.bf16.msra.mxu0 %v1158
        %1162 = vmatprep.subr.bf16.mxu0 0
        %1163 = vmatpush1.bf16.msra.mxu0 0
        %1164 = vmatprep.subr.bf16.mxu0 0
        %1165 = vmatpush1.bf16.msra.mxu0 0
        %1166 = vmatprep.subr.bf16.mxu0 0
        %1167 = vmatpush1.bf16.msra.mxu0 0
        %1168 = vmatprep.subr.bf16.mxu0 0
        %1169 = vmatpush1.bf16.msra.mxu0 0
        %1170 = vmatprep.subr.bf16.mxu0 0
        %1171 = vmatpush1.bf16.msra.mxu0 0
        %1172 = vmatprep.subr.bf16.mxu0 0
        %1173 = vmatpush1.bf16.msra.mxu0 0
        %1174 = vmatprep.subr.bf16.mxu0 0
        %1175 = vmatpush1.bf16.msra.mxu0 0
        %1176 = vmatprep.subr.bf16.mxu0 0
        %1177 = vmatpush1.bf16.msra.mxu0 0
        %1178 = vmatprep.subr.bf16.mxu0 0
        %1179 = vmatpush1.bf16.msra.mxu0 0
        %1180 = vmatprep.subr.bf16.mxu0 0
        %1181 = vmatpush1.bf16.msra.mxu0 0
        %1182 = vmatprep.subr.bf16.mxu0 0
        %1183 = vmatpush1.bf16.msra.mxu0 0
        %1184 = vmatprep.subr.bf16.mxu0 0
        %1185 = vmatpush1.bf16.msra.mxu0 0
        %1186 = vmatprep.subr.bf16.mxu0 0
        %1187 = vmatpush1.bf16.msra.mxu0 0
        %1188 = vmatprep.subr.bf16.mxu0 0
        %1189 = vmatpush1.bf16.msra.mxu0 0
        %1190 = vmatprep.subr.bf16.mxu0 0
        %1191 = vmatpush1.bf16.msra.mxu0 0
        %1192 = vmatprep.mubr.bf16.mxu0 0
        %1193 = vmatmul.mubr.bf16.gmra.mrb[0].mxu0 %v1146
        %v1194 = vpop.f32.mrb[0].mxu0
        %v1195 = vadd.f32 0.0, %v1194
        %v1196 = vpop.f32.mrb[0].mxu0
        %v1197 = vpop.f32.mrb[0].mxu0
        %v1198 = vadd.f32 0.0, %v1197
        %v1199 = vpop.f32.mrb[0].mxu0
        %1200 = vmatprep.mubr.bf16.mxu0 0
        %1201 = vmatmul.mubr.bf16.gmra.mrb[0].mxu0 %v1149
        %v1202 = vpop.f32.mrb[0].mxu0
        %v1203 = vadd.f32 0.0, %v1202
        %v1204 = vpop.f32.mrb[0].mxu0
        %v1205 = vpop.f32.mrb[0].mxu0
        %v1206 = vadd.f32 0.0, %v1205
        %v1207 = vpop.f32.mrb[0].mxu0
        %1208 = vmatprep.mubr.bf16.mxu0 0
        %1209 = vmatmul.mubr.bf16.gmra.mrb[0].mxu0 %v1152
        %v1210 = vpop.f32.mrb[0].mxu0
        %v1211 = vadd.f32 0.0, %v1210
        %v1212 = vpop.f32.mrb[0].mxu0
        %v1213 = vpop.f32.mrb[0].mxu0
        %v1214 = vadd.f32 0.0, %v1213
        %v1215 = vpop.f32.mrb[0].mxu0
        %1216 = vmatprep.mubr.bf16.mxu0 0
        %1217 = vmatmul.mubr.bf16.gmra.mrb[0].mxu0 %v1155
        %v1218 = vpop.f32.mrb[0].mxu0
        %v1219 = vadd.f32 0.0, %v1218
        %v1220 = vpop.f32.mrb[0].mxu0
        %v1221 = vpop.f32.mrb[0].mxu0
        %v1222 = vadd.f32 0.0, %v1221
        %v1223 = vpop.f32.mrb[0].mxu0
        %1224 = vdwg.mxu0
        %v1225 = vadd.f32 %v1067, %v1195
        %v1226 = vadd.f32 %v1068, %v1198
        %v1227 = vadd.f32 %v1069, %v1203
        %v1228 = vadd.f32 %v1070, %v1206
        %v1229 = vadd.f32 %v1071, %v1211
        %v1230 = vadd.f32 %v1072, %v1214
        %v1231 = vadd.f32 %v1073, %v1219
        %v1232 = vadd.f32 %v1074, %v1222
        %v1233 = vld [vmem:[%s956] sm:$0xe]
        %s1234 = scalar_lea.vmem %s210, 16
        %v1235 = vld [vmem:[%s1234] sm:$0x3]
        %v1237 = vunpack.c.l.b16 %v1233
        %v1238 = vpack.c.b16 %v1096, %v1237
        %v1239 = vrot.slane %v1238, 1
        %v1240 = vrot.slane %v1105, 1
        %v1241 = vsel %vm472, %v1239, %v1240
        %v1242 = vrot.slane %v1106, 1
        %v1243 = vsel %vm472, %v1240, %v1242
        %v1244 = vrot.slane %v1107, 1
        %v1245 = vsel %vm472, %v1242, %v1244
        %v1246 = vrot.slane %v1108, 1
        %v1247 = vsel %vm472, %v1244, %v1246
        %v1249 = vsel %vm305, %v1241, 0
        %v1252 = vsel %vm305, %v1243, 0
        %v1255 = vsel %vm305, %v1245, 0
        %v1258 = vsel %vm305, %v1247, 0
        %v1261 = vand.u32 %v1235, %v321
        %1263 = vmatprep.subr.bf16.mxu0 0
        %1264 = vmatpush1.bf16.msra.mxu0 %v1261
        %1265 = vmatprep.subr.bf16.mxu0 0
        %1266 = vmatpush1.bf16.msra.mxu0 0
        %1267 = vmatprep.subr.bf16.mxu0 0
        %1268 = vmatpush1.bf16.msra.mxu0 0
        %1269 = vmatprep.subr.bf16.mxu0 0
        %1270 = vmatpush1.bf16.msra.mxu0 0
        %1271 = vmatprep.subr.bf16.mxu0 0
        %1272 = vmatpush1.bf16.msra.mxu0 0
        %1273 = vmatprep.subr.bf16.mxu0 0
        %1274 = vmatpush1.bf16.msra.mxu0 0
        %1275 = vmatprep.subr.bf16.mxu0 0
        %1276 = vmatpush1.bf16.msra.mxu0 0
        %1277 = vmatprep.subr.bf16.mxu0 0
        %1278 = vmatpush1.bf16.msra.mxu0 0
        %1279 = vmatprep.subr.bf16.mxu0 0
        %1280 = vmatpush1.bf16.msra.mxu0 0
        %1281 = vmatprep.subr.bf16.mxu0 0
        %1282 = vmatpush1.bf16.msra.mxu0 0
        %1283 = vmatprep.subr.bf16.mxu0 0
        %1284 = vmatpush1.bf16.msra.mxu0 0
        %1285 = vmatprep.subr.bf16.mxu0 0
        %1286 = vmatpush1.bf16.msra.mxu0 0
        %1287 = vmatprep.subr.bf16.mxu0 0
        %1288 = vmatpush1.bf16.msra.mxu0 0
        %1289 = vmatprep.subr.bf16.mxu0 0
        %1290 = vmatpush1.bf16.msra.mxu0 0
        %1291 = vmatprep.subr.bf16.mxu0 0
        %1292 = vmatpush1.bf16.msra.mxu0 0
        %1293 = vmatprep.subr.bf16.mxu0 0
        %1294 = vmatpush1.bf16.msra.mxu0 0
        %1295 = vmatprep.mubr.bf16.mxu0 0
        %1296 = vmatmul.mubr.bf16.gmra.mrb[0].mxu0 %v1249
        %v1297 = vpop.f32.mrb[0].mxu0
        %v1298 = vadd.f32 0.0, %v1297
        %v1299 = vpop.f32.mrb[0].mxu0
        %v1300 = vpop.f32.mrb[0].mxu0
        %v1301 = vadd.f32 0.0, %v1300
        %v1302 = vpop.f32.mrb[0].mxu0
        %1303 = vmatprep.mubr.bf16.mxu0 0
        %1304 = vmatmul.mubr.bf16.gmra.mrb[0].mxu0 %v1252
        %v1305 = vpop.f32.mrb[0].mxu0
        %v1306 = vadd.f32 0.0, %v1305
        %v1307 = vpop.f32.mrb[0].mxu0
        %v1308 = vpop.f32.mrb[0].mxu0
        %v1309 = vadd.f32 0.0, %v1308
        %v1310 = vpop.f32.mrb[0].mxu0
        %1311 = vmatprep.mubr.bf16.mxu0 0
        %1312 = vmatmul.mubr.bf16.gmra.mrb[0].mxu0 %v1255
        %v1313 = vpop.f32.mrb[0].mxu0
        %v1314 = vadd.f32 0.0, %v1313
        %v1315 = vpop.f32.mrb[0].mxu0
        %v1316 = vpop.f32.mrb[0].mxu0
        %v1317 = vadd.f32 0.0, %v1316
        %v1318 = vpop.f32.mrb[0].mxu0
        %1319 = vmatprep.mubr.bf16.mxu0 0
        %1320 = vmatmul.mubr.bf16.gmra.mrb[0].mxu0 %v1258
        %v1321 = vpop.f32.mrb[0].mxu0
        %v1322 = vadd.f32 0.0, %v1321
        %v1323 = vpop.f32.mrb[0].mxu0
        %v1324 = vpop.f32.mrb[0].mxu0
        %v1325 = vadd.f32 0.0, %v1324
        %v1326 = vpop.f32.mrb[0].mxu0
        %1327 = vdwg.mxu0
        %v1328 = vadd.f32 %v1225, %v1298
        %v1329 = vadd.f32 %v1226, %v1301
        %v1330 = vadd.f32 %v1227, %v1306
        %v1331 = vadd.f32 %v1228, %v1309
        %v1332 = vadd.f32 %v1229, %v1314
        %v1333 = vadd.f32 %v1230, %v1317
        %v1334 = vadd.f32 %v1231, %v1322
        %v1335 = vadd.f32 %v1232, %v1325
        %v1337 = vlaneseq
        %v1338 = vshrl.u32 %v1337, 7
        %v1339 = vsub.s32 0, %v1338
        %v1340 = vrot.slane %v223, %v1339
        %v1342 = vadd.f32 %v1328, %v1340
        %v1343 = vadd.f32 %v1329, %v1340
        %v1344 = vadd.f32 %v1330, %v1340
        %v1345 = vadd.f32 %v1331, %v1340
        %v1346 = vadd.f32 %v1332, %v1340
        %v1347 = vadd.f32 %v1333, %v1340
        %v1348 = vadd.f32 %v1334, %v1340
        %v1349 = vadd.f32 %v1335, %v1340
        %vm1350 = vcmp.gt.f32.partialorder %v1342, 0.0
        %vm1351 = vcmp.gt.f32.partialorder %v1343, 0.0
        %vm1352 = vcmp.gt.f32.partialorder %v1344, 0.0
        %vm1353 = vcmp.gt.f32.partialorder %v1345, 0.0
        %vm1354 = vcmp.gt.f32.partialorder %v1346, 0.0
        %vm1355 = vcmp.gt.f32.partialorder %v1347, 0.0
        %vm1356 = vcmp.gt.f32.partialorder %v1348, 0.0
        %vm1357 = vcmp.gt.f32.partialorder %v1349, 0.0
        %v1358 = vmul.f32 %v1342, 0.1
        %v1359 = vmul.f32 %v1343, 0.1
        %v1360 = vmul.f32 %v1344, 0.1
        %v1361 = vmul.f32 %v1345, 0.1
        %v1362 = vmul.f32 %v1346, 0.1
        %v1363 = vmul.f32 %v1347, 0.1
        %v1364 = vmul.f32 %v1348, 0.1
        %v1365 = vmul.f32 %v1349, 0.1
        %v1366 = vsel %vm1350, %v1342, %v1358
        %v1367 = vsel %vm1351, %v1343, %v1359
        %v1368 = vsel %vm1352, %v1344, %v1360
        %v1369 = vsel %vm1353, %v1345, %v1361
        %v1370 = vsel %vm1354, %v1346, %v1362
        %v1371 = vsel %vm1355, %v1347, %v1363
        %v1372 = vsel %vm1356, %v1348, %v1364
        %v1373 = vsel %vm1357, %v1349, %v1365
        %v1374 = vpack.c.bf16 %v1367, %v1366
        %v1375 = vpack.c.bf16 %v1369, %v1368
        %v1376 = vpack.c.bf16 %v1371, %v1370
        %v1377 = vpack.c.bf16 %v1373, %v1372
        %v1382 = vunpack.c.l.b16 %v1374
        %v1383 = vunpack.c.h.b16 %v1374
        %v1384 = vunpack.c.l.b16 %v1375
        %v1385 = vunpack.c.h.b16 %v1375
        %v1386 = vunpack.c.l.b16 %v1376
        %v1387 = vunpack.c.h.b16 %v1376
        %v1388 = vunpack.c.l.b16 %v1377
        %v1389 = vunpack.c.h.b16 %v1377
        %v1390 = vpack.c.b16 %v1382, %v1382
        %v1391 = vpack.c.b16 %v1383, %v1383
        %v1392 = vpack.c.b16 %v1384, %v1384
        %v1393 = vpack.c.b16 %v1385, %v1385
        %v1394 = vpack.c.b16 %v1386, %v1386
        %v1395 = vpack.c.b16 %v1387, %v1387
        %v1396 = vpack.c.b16 %v1388, %v1388
        %v1397 = vpack.c.b16 %v1389, %v1389
        %s1406 = smul.u32 %s225, 8
        %s1407 = smul.addr %s1406, 4
        %s1408 = scalar_lea.vmem %s221, %s1407
        %vm1409 = vcmask 257024
        %1410 = vst.msk [vmem:[%s1408] sm:$0xf] %vm1409, %v1390
        %1411 = vst.msk [vmem:[%s1408 + $0x4] sm:$0xf] %vm1409, %v1391
        %1412 = vst.msk [vmem:[%s1408 + $0x8] sm:$0xf] %vm1409, %v1392
        %1413 = vst.msk [vmem:[%s1408 + $0xc] sm:$0xf] %vm1409, %v1393
        %1414 = vst.msk [vmem:[%s1408 + $0x10] sm:$0xf] %vm1409, %v1394
        %1415 = vst.msk [vmem:[%s1408 + $0x14] sm:$0xf] %vm1409, %v1395
        %1416 = vst.msk [vmem:[%s1408 + $0x18] sm:$0xf] %vm1409, %v1396
        %1417 = vst.msk [vmem:[%s1408 + $0x1c] sm:$0xf] %vm1409, %v1397
      $region37: #{tpu_custom_call.1} parent=31 // loop_footer
        %s229 = sadd.s32 1, %s225
      $region38: #{tpu_custom_call.1} parent=31 // loop_footer_branch
        %224 = sbr.rel target = $region34
      $region39: #{tpu_custom_call.1} parent=31 // loop_exit
        _
      %p1418 = scmp.lt.s32.totalorder %s18, 1
      %s1419 = scalar_select %p1418, %s18, 1
      %p1420 = scmp.lt.s32.totalorder %s19, 0
      %s1421 = scalar_select %p1420, %s19, 0
      %s1422 = smul.addr %s1419, 512
      %s1423 = sadd.s32 %s1421, %s1422
      %s1424 = smul.addr %s1423, 4
      %s1425 = scalar_lea.vmem %s3, %s1424
      // Predicated region
      $region40: #{tpu_custom_call.1} parent=31 // pred_check
        %p1426 = pneg %p124
      $region41: #{tpu_custom_call.1} parent=31 // pred_check_branch
        %1428 = sbr.rel (%p1426) target = $region43
      $region42: #{tpu_custom_call.1} parent=31 // pred_region
        _
      $region43: #{tpu_custom_call.1} parent=31 // pred_fallthru
        _
    $region32: #{tpu_custom_call.1} parent=5 // pred_fallthru
      _
    %p1429 = scmp.le.s32.totalorder 2, %s9
    // Predicated region
    $region44: #{tpu_custom_call.1} parent=5 // pred_check
      %p1430 = pneg %p1429
    $region45: #{tpu_custom_call.1} parent=5 // pred_check_branch
      %1432 = sbr.rel (%p1430) target = $region47
    $region46: #{tpu_custom_call.1} parent=5 // pred_region
      %s1433 = ssub.s32 %s9, 2
      // Predicated region
      $region48: #{tpu_custom_call.1} parent=46 // pred_check
        %p1434 = pneg %p130
      $region49: #{tpu_custom_call.1} parent=46 // pred_check_branch
        %1436 = sbr.rel (%p1434) target = $region51
      $region50: #{tpu_custom_call.1} parent=46 // pred_region
        %p1437 = scmp.lt.s32.totalorder %s20, 1
        %s1438 = scalar_select %p1437, %s20, 1
        %p1439 = scmp.lt.s32.totalorder %s21, 0
        %s1440 = scalar_select %p1439, %s21, 0
        %s1441 = smul.addr %s1438, 512
        %s1442 = sadd.s32 %s1440, %s1441
        %s1443 = smul.addr %s1442, 4
        %s1444 = scalar_lea.vmem %s3, %s1443
      $region51: #{tpu_custom_call.1} parent=46 // pred_fallthru
        _
    $region47: #{tpu_custom_call.1} parent=5 // pred_fallthru
      _
  $region6: #{tpu_custom_call.1} parent=0 // loop_footer
    %s13 = sadd.s32 1, %s9
  $region7: #{tpu_custom_call.1} parent=0 // loop_footer_branch
    %8 = sbr.rel target = $region3
  $region8: #{tpu_custom_call.1} parent=0 // loop_exit
    _

</llo_original>
